<compile_context>
chip_gen: v6e
topology: v6e:2x2x1
jax: 0.10.0
libtpu: 0.0.40
codegen_flags: <defaults>
</compile_context>

<pallas_src>
import functools

import jax
import jax.numpy as jnp
from jax.experimental import pallas as pl
from jax.experimental.pallas import tpu as pltpu

honey_new = [64, 64, 64, 64, 64, 64, 64,
             128, 128, 128, 128, 128, 128, 128, 128,
             256, 256, 256, 256, 256, 256, 256, 256, 256, 256, 256, 256,
             512, 512, 512, 512, 512, 512,
             256, 512, 1024, 2048]

LABEL_NUM = 81
NUM_DEFAULTS = [4, 6, 6, 6, 4, 4]
OUT_CHANNELS = [1024, 512, 512, 256, 256, 256]
EXTRA_MID = [256, 256, 128, 128, 128]

_VMEM_LIMIT = 48 * 1024 * 1024      # well above worst-case tile set, below v7x physical


def _round_up(x, m):
    return (x + m - 1) // m * m


def _cdiv(a, b):
    return -(-a // b)


def _cpad(c):
    return _round_up(c, 128)


# ----------------------------------------------------------------------------
# Pallas kernels
# ----------------------------------------------------------------------------
def gemm_kernel(a_ref, w_ref, b_ref, o_ref, *, relu):
    acc = jnp.dot(a_ref[...], w_ref[...], preferred_element_type=jnp.float32)
    out = acc + b_ref[...]
    if relu:
        out = jnp.maximum(out, 0.0)
    o_ref[...] = out.astype(o_ref.dtype)


def gemm_res_kernel(a_ref, w_ref, b_ref, r_ref, o_ref, *, relu):
    acc = jnp.dot(a_ref[...], w_ref[...], preferred_element_type=jnp.float32)
    out = acc + b_ref[...] + r_ref[...].astype(jnp.float32)
    if relu:
        out = jnp.maximum(out, 0.0)
    o_ref[...] = out.astype(o_ref.dtype)


def conv3x3_kernel(*refs, wp, ow, tb, chunk_rows, relu, has_halo):
    # Banded:      refs = (x_ref, h_ref, w_ref, b_ref, o_ref, band_ref)
    # Single band: refs = (x_ref, w_ref, b_ref, o_ref)
    # x_ref:  (1, rows, C) flattened rows of the spatially padded image (width = wp)
    # w_ref:  (9, C, TN) per-tap weights (BN scale folded, bf16); b_ref: (1, TN) f32 bias
    # o_ref:  (1, tb, ow, TN) output rows, already cropped to the real width ow
    if has_halo:
        x_ref, h_ref, w_ref, b_ref, o_ref, band_ref = refs
        tbw = tb * wp
        hbw = h_ref.shape[1]
        band_ref[0:tbw] = x_ref[0]
        band_ref[tbw:tbw + hbw] = h_ref[0]
        # tail slack rows for the bottom-right corner over-read (feeds cropped cols only)
        band_ref[tbw + hbw:] = jnp.zeros(
            (band_ref.shape[0] - tbw - hbw, band_ref.shape[1]), band_ref.dtype)

        def tap(lo, sz):
            return band_ref[lo:lo + sz, :]
    else:
        x_ref, w_ref, b_ref, o_ref = refs

        def tap(lo, sz):
            return x_ref[0, lo:lo + sz, :]

    bias = b_ref[...]
    r0 = 0
    while r0 < tb:                              # static Python loop over row chunks
        rows = min(chunk_rows, tb - r0)
        sz = rows * wp
        base = r0 * wp
        acc = None
        for ki in range(3):
            for kj in range(3):
                d = jnp.dot(tap(base + ki * wp + kj, sz), w_ref[ki * 3 + kj],
                            preferred_element_type=jnp.float32)
                acc = d if acc is None else acc + d
        out = acc + bias
        if relu:
            out = jnp.maximum(out, 0.0)
        out = out.astype(o_ref.dtype)
        for rr in range(rows):                  # crop wrap-around columns before the store
            o_ref[0, r0 + rr, :, :] = out[rr * wp:rr * wp + ow, :]
        r0 += rows


def maxpool_kernel(x_ref, o_ref, *, oh, ow, c):
    # x_ref: (1, Hp//2, 2, Wpp//2, 2C) padded input with rows paired (even/odd) on dim 2
    # and columns paired inside the last (lane) dim; o_ref: (1, OH, OW, C).
    ev = x_ref[0, :, 0]                         # even input rows  (Hp//2, Wpp//2, 2C)
    od = x_ref[0, :, 1]                         # odd  input rows
    ev0, ev1 = ev[:, :, :c], ev[:, :, c:]       # even/odd columns of even rows
    od0, od1 = od[:, :, :c], od[:, :, c:]
    cm_e = jnp.maximum(jnp.maximum(ev0[:, :ow, :], ev1[:, :ow, :]), ev0[:, 1:ow + 1, :])
    cm_o = jnp.maximum(jnp.maximum(od0[:, :ow, :], od1[:, :ow, :]), od0[:, 1:ow + 1, :])
    out = jnp.maximum(jnp.maximum(cm_e[:oh], cm_o[:oh]), cm_e[1:oh + 1])
    o_ref[0] = out


# ----------------------------------------------------------------------------
# Pallas wrappers
# ----------------------------------------------------------------------------
def gemm_bias_act(a, w, b, *, relu, residual=None):
    """out = relu?( (a @ w) + bias [+ residual] ); a,w,residual bf16, f32 accumulate.

    Edge M blocks read past the end of the A/residual arrays; results for those rows
    depend only on Pallas' masked stores (the OOB values never reach valid outputs)."""
    M, K = a.shape
    Np = w.shape[1]
    tm = min(512, _round_up(M, 8))
    tn = 256 if Np % 256 == 0 else 128
    grid = (_cdiv(M, tm), Np // tn)
    in_specs = [
        pl.BlockSpec((tm, K), lambda i, j: (i, 0)),
        pl.BlockSpec((K, tn), lambda i, j: (0, j)),
        pl.BlockSpec((1, tn), lambda i, j: (0, j)),
    ]
    args = [a, w, b]
    if residual is not None:
        in_specs.append(pl.BlockSpec((tm, tn), lambda i, j: (i, j)))
        args.append(residual)
        kernel = functools.partial(gemm_res_kernel, relu=relu)
    else:
        kernel = functools.partial(gemm_kernel, relu=relu)
    return pl.pallas_call(
        kernel,
        out_shape=jax.ShapeDtypeStruct((M, Np), jnp.bfloat16),
        grid=grid,
        in_specs=in_specs,
        out_specs=pl.BlockSpec((tm, tn), lambda i, j: (i, j)),
        compiler_params=pltpu.CompilerParams(
            dimension_semantics=("parallel", "parallel"),
            vmem_limit_bytes=_VMEM_LIMIT),
    )(*args)


def conv3x3_direct(x, p, *, pad, relu):
    """Direct 3x3 stride-1 conv + bias + optional ReLU (no im2col, no output crop pass).

    The spatially padded activation is flattened to (N, Hp*Wp, C).  Maps with OH <= 40
    are one band per (n, cout-tile) grid step; larger maps use TB-row bands plus a 2-row
    halo fetched through a second BlockSpec on the same array.  The 9 taps run as shifted
    GEMMs in row chunks small enough for the f32 accumulator to stay in vregs, and the
    output is written directly in cropped (N, OH, OW, Cout) form."""
    N, H, W, C = x.shape
    OH = H + 2 * pad - 2
    OW = W + 2 * pad - 2
    w, b = p["w"], p["b"]
    coutp = w.shape[-1]
    tn = 256 if coutp % 256 == 0 else 128
    Wp = _round_up(W + 2 * pad, 8)             # sublane-aligned padded width

    single = OH <= 40
    if single:
        TB = OH
        nb = 1
        Hp = OH + 3                            # +1 row of slack for the corner over-read
    else:
        TB, HALO = 16, 2
        assert TB % HALO == 0 and HALO >= 2    # halo index_map / 3x3 support requirement
        nb = _cdiv(OH, TB)
        Hp = nb * TB + 2                       # the scratch absorbs the +2-element over-read
    pad_bottom = Hp - H - pad
    pad_right = Wp - W - pad
    assert pad_bottom >= 0 and pad_right >= 0
    xp = jnp.pad(x, ((0, 0), (pad, pad_bottom), (pad, pad_right), (0, 0)))
    xf = xp.reshape(N, Hp * Wp, C)

    # rows per accumulation chunk: keep the f32 accumulator ~<=96 KiB (vreg resident),
    # but bound the static unroll at ~12 chunks per band.
    chunk_rows = max(1, min(TB, (96 * 1024) // (Wp * tn * 4)))
    chunk_rows = max(chunk_rows, _cdiv(TB, 12))
    kernel = functools.partial(conv3x3_kernel, wp=Wp, ow=OW, tb=TB,
                               chunk_rows=chunk_rows, relu=relu, has_halo=not single)
    out_shape = jax.ShapeDtypeStruct((N, OH, OW, coutp), jnp.bfloat16)

    if single:
        grid = (N, coutp // tn)
        in_specs = [
            pl.BlockSpec((1, Hp * Wp, C), lambda n, j: (n, 0, 0)),
            pl.BlockSpec((9, C, tn), lambda n, j: (0, 0, j)),
            pl.BlockSpec((1, tn), lambda n, j: (0, j)),
        ]
        out_specs = pl.BlockSpec((1, TB, OW, tn), lambda n, j: (n, 0, 0, j))
        scratch = []
        sem = ("parallel", "parallel")
        args = (xf, w, b)
    else:
        tbw, hbw = TB * Wp, HALO * Wp
        grid = (N, coutp // tn, nb)            # row bands fastest: weights stay resident
        halo_step = TB // HALO
        in_specs = [
            pl.BlockSpec((1, tbw, C), lambda n, j, r: (n, r, 0)),
            pl.BlockSpec((1, hbw, C), lambda n, j, r: (n, (r + 1) * halo_step, 0)),
            pl.BlockSpec((9, C, tn), lambda n, j, r: (0, 0, j)),
            pl.BlockSpec((1, tn), lambda n, j, r: (0, j)),
        ]
        out_specs = pl.BlockSpec((1, TB, OW, tn), lambda n, j, r: (n, r, 0, j))
        scratch = [pltpu.VMEM((tbw + hbw + 8, C), x.dtype)]
        sem = ("parallel", "parallel", "parallel")
        args = (xf, xf, w, b)

    return pl.pallas_call(
        kernel,
        out_shape=out_shape,
        grid=grid,
        in_specs=in_specs,
        out_specs=out_specs,
        scratch_shapes=scratch,
        compiler_params=pltpu.CompilerParams(
            dimension_semantics=sem, vmem_limit_bytes=_VMEM_LIMIT),
    )(*args)


def maxpool2d(x, k=3, stride=2, pad=1):
    """nn.MaxPool2d(3, stride=2, padding=1) as a direct Pallas kernel (no im2col).

    Rows are paired (even/odd) into a new dim and columns are paired into the lane dim by
    a free reshape of the padded row-major buffer, so all stride-2 selections become
    unit-stride shifted slices / lane-half slices inside the kernel."""
    assert k == 3 and stride == 2 and pad == 1
    N, H, W, C = x.shape
    OH = (H + 2 * pad - k) // stride + 1
    OW = (W + 2 * pad - k) // stride + 1
    Hp = 2 * OH + 2
    Wpp = 2 * OW + 2
    xp = jnp.pad(x, ((0, 0), (pad, Hp - H - pad), (pad, Wpp - W - pad), (0, 0)),
                 constant_values=-1e9)          # < any ReLU activation
    xr = xp.reshape(N, Hp // 2, 2, Wpp // 2, 2 * C)   # free regrouping of row-major data
    return pl.pallas_call(
        functools.partial(maxpool_kernel, oh=OH, ow=OW, c=C),
        out_shape=jax.ShapeDtypeStruct((N, OH, OW, C), x.dtype),
        grid=(N,),
        in_specs=[pl.BlockSpec((1, Hp // 2, 2, Wpp // 2, 2 * C),
                               lambda n: (n, 0, 0, 0, 0))],
        out_specs=pl.BlockSpec((1, OH, OW, C), lambda n: (n, 0, 0, 0)),
        compiler_params=pltpu.CompilerParams(
            dimension_semantics=("parallel",), vmem_limit_bytes=_VMEM_LIMIT),
    )(xr)


def im2col(x, kh, kw, stride, pad, pad_value=0.0):
    """x: NHWC -> patches (N, OH, OW, kh*kw, C). Only used for the 7x7 stem and the four
    stride-2 3x3 convs (small, one-off tensors)."""
    N, H, W, C = x.shape
    xp = x
    if pad > 0:
        xp = jnp.pad(x, ((0, 0), (pad, pad), (pad, pad), (0, 0)),
                     constant_values=pad_value)
    OH = (H + 2 * pad - kh) // stride + 1
    OW = (W + 2 * pad - kw) // stride + 1
    cols = []
    for i in range(kh):
        for j in range(kw):
            cols.append(xp[:, i:i + stride * (OH - 1) + 1:stride,
                           j:j + stride * (OW - 1) + 1:stride, :])
    patches = jnp.stack(cols, axis=3)
    return patches, (N, OH, OW)


def conv_1x1(x, p, *, stride=1, relu=True, residual=None):
    if stride != 1:
        x = x[:, ::stride, ::stride, :]
    N, H, W, C = x.shape
    a = x.reshape(N * H * W, C)                 # free reshape, no padding copy
    r = None
    if residual is not None:
        r = residual.reshape(N * H * W, residual.shape[-1])
    out = gemm_bias_act(a, p["w"], p["b"], relu=relu, residual=r)
    return out.reshape(N, H, W, -1)


def conv_im2col(x, p, *, kh, kw, stride, pad, relu=True):
    patches, (N, OH, OW) = im2col(x, kh, kw, stride, pad)
    a = patches.reshape(N * OH * OW, kh * kw * x.shape[-1])
    out = gemm_bias_act(a, p["w"], p["b"], relu=relu)
    return out.reshape(N, OH, OW, -1)


# ----------------------------------------------------------------------------
# Parameter construction (deterministic, synthetic; BN folded, padded, bf16 - build time)
# ----------------------------------------------------------------------------
def make_conv_bn(key, kh, kw, cin, cout, *, cin_p=None, with_bn=True):
    cin_p = _cpad(cin) if cin_p is None else cin_p
    cout_p = _cpad(cout)
    k1, k2, k3, k4, k5 = jax.random.split(key, 5)
    w = jax.random.normal(k1, (kh, kw, cin, cout), jnp.float32) * (2.0 / (kh * kw * cin)) ** 0.5
    if with_bn:
        gamma = 1.0 + 0.1 * jax.random.normal(k2, (cout,), jnp.float32)
        beta = 0.1 * jax.random.normal(k3, (cout,), jnp.float32)
        mean = 0.1 * jax.random.normal(k4, (cout,), jnp.float32)
        var = jnp.abs(jax.random.normal(k5, (cout,), jnp.float32)) * 0.1 + 1.0
        scale = gamma * jax.lax.rsqrt(var + 1e-5)
        bias = beta - mean * scale
        w = w * scale                           # fold BN scale into the weights
    else:
        bias = 0.05 * jax.random.normal(k2, (cout,), jnp.float32)
    wp = jnp.zeros((kh, kw, cin_p, cout_p), jnp.float32).at[:, :, :cin, :cout].set(w)
    bp = jnp.zeros((1, cout_p), jnp.float32).at[0, :cout].set(bias)
    return wp, bp


def as_gemm(wp, bp):
    kh, kw, cinp, coutp = wp.shape
    return {"w": wp.reshape(kh * kw * cinp, coutp).astype(jnp.bfloat16), "b": bp}


def as_direct(wp, bp):
    kh, kw, cinp, coutp = wp.shape
    return {"w": wp.reshape(kh * kw, cinp, coutp).astype(jnp.bfloat16), "b": bp}


def build_params(key, honey):
    keys = iter(jax.random.split(key, 256))
    params = {}
    # honey layout: [0]=stem width; [1..32]=conv1/conv2 widths per bottleneck block;
    # [33..36]=per-layer output widths (256, 512, 1024, 2048).
    stem_out = honey[0]
    params["stem"] = as_gemm(*make_conv_bn(next(keys), 7, 7, 3, stem_out, cin_p=3))
    layer_outs = honey[33:37]
    blocks_per_layer = [3, 4, 6]                # feature_extractor stops after layer3
    first_stride = (1, 2, 1)                    # conv4_block1 strides forced to (1,1)
    idx = 1
    in_ch = stem_out
    layers = []
    for li, nb in enumerate(blocks_per_layer):
        out_ch = layer_outs[li]
        blks = []
        for bi in range(nb):
            w1, w2 = honey[idx], honey[idx + 1]
            idx += 2
            s = first_stride[li] if bi == 0 else 1
            blk = {
                "conv1": as_gemm(*make_conv_bn(next(keys), 1, 1, in_ch, w1)),
                "conv2": (as_gemm if s != 1 else as_direct)(
                    *make_conv_bn(next(keys), 3, 3, w1, w2)),
                "conv3": as_gemm(*make_conv_bn(next(keys), 1, 1, w2, out_ch)),
            }
            if bi == 0:
                blk["downsample"] = as_gemm(*make_conv_bn(next(keys), 1, 1, in_ch, out_ch))
            blks.append(blk)
            in_ch = out_ch
        layers.append(blks)
    params["layers"] = layers
    # SSD additional feature blocks
    extras = []
    for i, (ci, co, cm) in enumerate(zip(OUT_CHANNELS[:-1], OUT_CHANNELS[1:], EXTRA_MID)):
        extras.append({
            "c1": as_gemm(*make_conv_bn(next(keys), 1, 1, ci, cm)),
            "c2": (as_gemm if i < 3 else as_direct)(*make_conv_bn(next(keys), 3, 3, cm, co)),
        })
    params["extras"] = extras
    # fused loc+conf heads (3x3 pad 1, with bias, no BN, no ReLU):
    # output channels [0, nd*4) -> loc, [nd*4, nd*85) -> conf, remainder zero padding.
    heads = []
    for nd, oc in zip(NUM_DEFAULTS, OUT_CHANNELS):
        heads.append(as_direct(*make_conv_bn(next(keys), 3, 3, oc,
                                             nd * (4 + LABEL_NUM), with_bn=False)))
    params["head"] = heads
    return params


# ----------------------------------------------------------------------------
# Forward pass
# ----------------------------------------------------------------------------
def bottleneck(x, bp, stride):
    out = conv_1x1(x, bp["conv1"], relu=True)
    if stride == 1:
        out = conv3x3_direct(out, bp["conv2"], pad=1, relu=True)
    else:
        out = conv_im2col(out, bp["conv2"], kh=3, kw=3, stride=stride, pad=1, relu=True)
    if "downsample" in bp:
        identity = conv_1x1(x, bp["downsample"], stride=stride, relu=False)
    else:
        identity = x
    # conv3 + bias + residual add (f32) + ReLU fused in one Pallas GEMM kernel
    return conv_1x1(out, bp["conv3"], relu=True, residual=identity)


def snas_forward(x_nchw, params):
    # external interface NCHW (PyTorch); compute NHWC bf16, f32 accumulate.
    x = jnp.transpose(x_nchw, (0, 2, 3, 1)).astype(jnp.bfloat16)
    x = conv_im2col(x, params["stem"], kh=7, kw=7, stride=2, pad=3, relu=True)
    x = maxpool2d(x, 3, 2, 1)
    first_stride = (1, 2, 1)
    for li, blocks in enumerate(params["layers"]):
        for bi, bp in enumerate(blocks):
            x = bottleneck(x, bp, first_stride[li] if bi == 0 else 1)
    feats = [x]
    for i, bp in enumerate(params["extras"]):
        x = conv_1x1(x, bp["c1"], relu=True)
        if i < 3:
            x = conv_im2col(x, bp["c2"], kh=3, kw=3, stride=2, pad=1, relu=True)
        else:
            x = conv3x3_direct(x, bp["c2"], pad=0, relu=True)
        feats.append(x)
    locs, confs = [], []
    for f, hp, nd in zip(feats, params["head"], NUM_DEFAULTS):
        n = f.shape[0]
        out = conv3x3_direct(f, hp, pad=1, relu=False)     # fused loc+conf head
        l = out[..., :nd * 4]
        c = out[..., nd * 4:nd * (4 + LABEL_NUM)]
        locs.append(jnp.transpose(l, (0, 3, 1, 2)).reshape(n, 4, -1).astype(jnp.float32))
        confs.append(jnp.transpose(c, (0, 3, 1, 2)).reshape(n, LABEL_NUM, -1)
                     .astype(jnp.float32))
    return jnp.concatenate(locs, axis=2), jnp.concatenate(confs, axis=2)


if __name__ == "__main__":
    key = jax.random.PRNGKey(0)
    k_x, k_p = jax.random.split(key)

    # Standalone correctness checks of the direct 3x3 kernel against lax.conv:
    # single-band pad=1, banded (OH>40) pad=1, and single-band "valid" pad=0 paths.
    for (hh, ww, cc, pad) in [(12, 10, 64, 1), (50, 20, 128, 1), (7, 9, 64, 0)]:
        kt1, kt2 = jax.random.split(jax.random.PRNGKey(hh * 100 + ww))
        xt = jax.random.normal(kt1, (1, hh, ww, cc), jnp.float32).astype(jnp.bfloat16)
        wt = (jax.random.normal(kt2, (3, 3, cc, 128), jnp.float32) * 0.05).astype(jnp.bfloat16)
        p_t = {"w": wt.reshape(9, cc, 128), "b": jnp.zeros((1, 128), jnp.float32)}
        got = conv3x3_direct(xt, p_t, pad=pad, relu=False).astype(jnp.float32)
        ref = jax.lax.conv_general_dilated(
            xt.astype(jnp.float32), wt.astype(jnp.float32), (1, 1),
            ((pad, pad), (pad, pad)), dimension_numbers=("NHWC", "HWIO", "NHWC"))
        assert got.shape == ref.shape, (got.shape, ref.shape)
        assert jnp.allclose(got, ref, atol=5e-2, rtol=5e-2), float(jnp.max(jnp.abs(got - ref)))

    # Standalone correctness check of the direct max-pool kernel.
    xq = jax.random.normal(jax.random.PRNGKey(7), (1, 13, 15, 128), jnp.float32).astype(jnp.bfloat16)
    gotp = maxpool2d(xq).astype(jnp.float32)
    refp = jax.lax.reduce_window(xq.astype(jnp.float32), -jnp.inf, jax.lax.max,
                                 (1, 3, 3, 1), (1, 2, 2, 1),
                                 ((0, 0), (1, 1), (1, 1), (0, 0)))
    assert gotp.shape == refp.shape, (gotp.shape, refp.shape)
    assert jnp.allclose(gotp, refp, atol=1e-6), float(jnp.max(jnp.abs(gotp - refp)))

    # 257 is the smallest spatial size for which the SSD extra-feature pyramid
    # (three stride-2 3x3 convs then two "valid" 3x3 convs) stays >= 1x1.
    x = jax.random.normal(k_x, (2, 3, 257, 257), jnp.float32)
    params = build_params(k_p, honey_new)

    fwd = jax.jit(snas_forward)
    locs, confs = fwd(x, params)
    jax.block_until_ready((locs, confs))

    feat_sizes = [33, 17, 9, 5, 3, 1]
    n_anchor = sum(nd * s * s for nd, s in zip(NUM_DEFAULTS, feat_sizes))
    assert locs.shape == (2, 4, n_anchor), locs.shape
    assert confs.shape == (2, LABEL_NUM, n_anchor), confs.shape
    assert bool(jnp.all(jnp.isfinite(locs))) and bool(jnp.all(jnp.isfinite(confs)))
    print("KERNEL_OK")
</pallas_src>

<mosaic_0001>
module attributes {stable_mosaic.version = 11 : i64} {
  func.func @conv3x3_kernel(%arg0: i32, %arg1: i32, %arg2: memref<1x240x64xbf16, #tpu.memory_space<vmem>>, %arg3: memref<9x64x128xbf16, #tpu.memory_space<vmem>>, %arg4: memref<1x128xf32, #tpu.memory_space<vmem>>, %arg5: memref<1x12x10x128xbf16, #tpu.memory_space<vmem>>) attributes {dimension_semantics = [#tpu.dimension_semantics<parallel>, #tpu.dimension_semantics<parallel>], iteration_bounds = array<i64: 1, 1>, scalar_prefetch = 0 : i64, scratch_operands = 0 : i64, tpu.core_type = #tpu.core_type<tc>, window_params = [{transform_indices = @transform_0, window_bounds = array<i64: 1, 240, 64>}, {transform_indices = @transform_1, window_bounds = array<i64: 9, 64, 128>}, {transform_indices = @transform_2, window_bounds = array<i64: 1, 128>}, {transform_indices = @transform_3, window_bounds = array<i64: 1, 12, 10, 128>}]} {
    %c0 = arith.constant 0 : index
    %c0_0 = arith.constant 0 : index
    %0 = vector.load %arg4[%c0, %c0_0] : memref<1x128xf32, #tpu.memory_space<vmem>>, vector<1x128xf32>
    %c0_1 = arith.constant 0 : index
    %c0_2 = arith.constant 0 : index
    %c0_3 = arith.constant 0 : index
    %1 = vector.load %arg2[%c0_1, %c0_2, %c0_3] : memref<1x240x64xbf16, #tpu.memory_space<vmem>>, vector<1x192x64xbf16>
    %2 = vector.shape_cast %1 : vector<1x192x64xbf16> to vector<192x64xbf16>
    %c0_4 = arith.constant 0 : index
    %c0_5 = arith.constant 0 : index
    %c0_6 = arith.constant 0 : index
    %3 = vector.load %arg3[%c0_4, %c0_5, %c0_6] : memref<9x64x128xbf16, #tpu.memory_space<vmem>>, vector<1x64x128xbf16>
    %4 = vector.shape_cast %3 : vector<1x64x128xbf16> to vector<64x128xbf16>
    %cst = arith.constant dense<0.000000e+00> : vector<192x128xf32>
    %5 = tpu.matmul %2, %4, %cst {dimension_numbers = #tpu.dot_dimension_numbers<[1], [0], [0], [1], [0, 0, 1, 1], [], []>} : vector<192x64xbf16>, vector<64x128xbf16>, vector<192x128xf32> -> vector<192x128xf32>
    %c0_7 = arith.constant 0 : index
    %c1 = arith.constant 1 : index
    %c0_8 = arith.constant 0 : index
    %6 = vector.load %arg2[%c0_7, %c1, %c0_8] : memref<1x240x64xbf16, #tpu.memory_space<vmem>>, vector<1x192x64xbf16>
    %7 = vector.shape_cast %6 : vector<1x192x64xbf16> to vector<192x64xbf16>
    %c1_9 = arith.constant 1 : index
    %c0_10 = arith.constant 0 : index
    %c0_11 = arith.constant 0 : index
    %8 = vector.load %arg3[%c1_9, %c0_10, %c0_11] : memref<9x64x128xbf16, #tpu.memory_space<vmem>>, vector<1x64x128xbf16>
    %9 = vector.shape_cast %8 : vector<1x64x128xbf16> to vector<64x128xbf16>
    %cst_12 = arith.constant dense<0.000000e+00> : vector<192x128xf32>
    %10 = tpu.matmul %7, %9, %cst_12 {dimension_numbers = #tpu.dot_dimension_numbers<[1], [0], [0], [1], [0, 0, 1, 1], [], []>} : vector<192x64xbf16>, vector<64x128xbf16>, vector<192x128xf32> -> vector<192x128xf32>
    %11 = arith.addf %5, %10 : vector<192x128xf32>
    %c0_13 = arith.constant 0 : index
    %c2 = arith.constant 2 : index
    %c0_14 = arith.constant 0 : index
    %12 = vector.load %arg2[%c0_13, %c2, %c0_14] : memref<1x240x64xbf16, #tpu.memory_space<vmem>>, vector<1x192x64xbf16>
    %13 = vector.shape_cast %12 : vector<1x192x64xbf16> to vector<192x64xbf16>
    %c2_15 = arith.constant 2 : index
    %c0_16 = arith.constant 0 : index
    %c0_17 = arith.constant 0 : index
    %14 = vector.load %arg3[%c2_15, %c0_16, %c0_17] : memref<9x64x128xbf16, #tpu.memory_space<vmem>>, vector<1x64x128xbf16>
    %15 = vector.shape_cast %14 : vector<1x64x128xbf16> to vector<64x128xbf16>
    %cst_18 = arith.constant dense<0.000000e+00> : vector<192x128xf32>
    %16 = tpu.matmul %13, %15, %cst_18 {dimension_numbers = #tpu.dot_dimension_numbers<[1], [0], [0], [1], [0, 0, 1, 1], [], []>} : vector<192x64xbf16>, vector<64x128xbf16>, vector<192x128xf32> -> vector<192x128xf32>
    %17 = arith.addf %11, %16 : vector<192x128xf32>
    %c0_19 = arith.constant 0 : index
    %c16 = arith.constant 16 : index
    %c0_20 = arith.constant 0 : index
    %18 = vector.load %arg2[%c0_19, %c16, %c0_20] : memref<1x240x64xbf16, #tpu.memory_space<vmem>>, vector<1x192x64xbf16>
    %19 = vector.shape_cast %18 : vector<1x192x64xbf16> to vector<192x64xbf16>
    %c3 = arith.constant 3 : index
    %c0_21 = arith.constant 0 : index
    %c0_22 = arith.constant 0 : index
    %20 = vector.load %arg3[%c3, %c0_21, %c0_22] : memref<9x64x128xbf16, #tpu.memory_space<vmem>>, vector<1x64x128xbf16>
    %21 = vector.shape_cast %20 : vector<1x64x128xbf16> to vector<64x128xbf16>
    %cst_23 = arith.constant dense<0.000000e+00> : vector<192x128xf32>
    %22 = tpu.matmul %19, %21, %cst_23 {dimension_numbers = #tpu.dot_dimension_numbers<[1], [0], [0], [1], [0, 0, 1, 1], [], []>} : vector<192x64xbf16>, vector<64x128xbf16>, vector<192x128xf32> -> vector<192x128xf32>
    %23 = arith.addf %17, %22 : vector<192x128xf32>
    %c0_24 = arith.constant 0 : index
    %c17 = arith.constant 17 : index
    %c0_25 = arith.constant 0 : index
    %24 = vector.load %arg2[%c0_24, %c17, %c0_25] : memref<1x240x64xbf16, #tpu.memory_space<vmem>>, vector<1x192x64xbf16>
    %25 = vector.shape_cast %24 : vector<1x192x64xbf16> to vector<192x64xbf16>
    %c4 = arith.constant 4 : index
    %c0_26 = arith.constant 0 : index
    %c0_27 = arith.constant 0 : index
    %26 = vector.load %arg3[%c4, %c0_26, %c0_27] : memref<9x64x128xbf16, #tpu.memory_space<vmem>>, vector<1x64x128xbf16>
    %27 = vector.shape_cast %26 : vector<1x64x128xbf16> to vector<64x128xbf16>
    %cst_28 = arith.constant dense<0.000000e+00> : vector<192x128xf32>
    %28 = tpu.matmul %25, %27, %cst_28 {dimension_numbers = #tpu.dot_dimension_numbers<[1], [0], [0], [1], [0, 0, 1, 1], [], []>} : vector<192x64xbf16>, vector<64x128xbf16>, vector<192x128xf32> -> vector<192x128xf32>
    %29 = arith.addf %23, %28 : vector<192x128xf32>
    %c0_29 = arith.constant 0 : index
    %c18 = arith.constant 18 : index
    %c0_30 = arith.constant 0 : index
    %30 = vector.load %arg2[%c0_29, %c18, %c0_30] : memref<1x240x64xbf16, #tpu.memory_space<vmem>>, vector<1x192x64xbf16>
    %31 = vector.shape_cast %30 : vector<1x192x64xbf16> to vector<192x64xbf16>
    %c5 = arith.constant 5 : index
    %c0_31 = arith.constant 0 : index
    %c0_32 = arith.constant 0 : index
    %32 = vector.load %arg3[%c5, %c0_31, %c0_32] : memref<9x64x128xbf16, #tpu.memory_space<vmem>>, vector<1x64x128xbf16>
    %33 = vector.shape_cast %32 : vector<1x64x128xbf16> to vector<64x128xbf16>
    %cst_33 = arith.constant dense<0.000000e+00> : vector<192x128xf32>
    %34 = tpu.matmul %31, %33, %cst_33 {dimension_numbers = #tpu.dot_dimension_numbers<[1], [0], [0], [1], [0, 0, 1, 1], [], []>} : vector<192x64xbf16>, vector<64x128xbf16>, vector<192x128xf32> -> vector<192x128xf32>
    %35 = arith.addf %29, %34 : vector<192x128xf32>
    %c0_34 = arith.constant 0 : index
    %c32 = arith.constant 32 : index
    %c0_35 = arith.constant 0 : index
    %36 = vector.load %arg2[%c0_34, %c32, %c0_35] : memref<1x240x64xbf16, #tpu.memory_space<vmem>>, vector<1x192x64xbf16>
    %37 = vector.shape_cast %36 : vector<1x192x64xbf16> to vector<192x64xbf16>
    %c6 = arith.constant 6 : index
    %c0_36 = arith.constant 0 : index
    %c0_37 = arith.constant 0 : index
    %38 = vector.load %arg3[%c6, %c0_36, %c0_37] : memref<9x64x128xbf16, #tpu.memory_space<vmem>>, vector<1x64x128xbf16>
    %39 = vector.shape_cast %38 : vector<1x64x128xbf16> to vector<64x128xbf16>
    %cst_38 = arith.constant dense<0.000000e+00> : vector<192x128xf32>
    %40 = tpu.matmul %37, %39, %cst_38 {dimension_numbers = #tpu.dot_dimension_numbers<[1], [0], [0], [1], [0, 0, 1, 1], [], []>} : vector<192x64xbf16>, vector<64x128xbf16>, vector<192x128xf32> -> vector<192x128xf32>
    %41 = arith.addf %35, %40 : vector<192x128xf32>
    %c0_39 = arith.constant 0 : index
    %c33 = arith.constant 33 : index
    %c0_40 = arith.constant 0 : index
    %42 = vector.load %arg2[%c0_39, %c33, %c0_40] : memref<1x240x64xbf16, #tpu.memory_space<vmem>>, vector<1x192x64xbf16>
    %43 = vector.shape_cast %42 : vector<1x192x64xbf16> to vector<192x64xbf16>
    %c7 = arith.constant 7 : index
    %c0_41 = arith.constant 0 : index
    %c0_42 = arith.constant 0 : index
    %44 = vector.load %arg3[%c7, %c0_41, %c0_42] : memref<9x64x128xbf16, #tpu.memory_space<vmem>>, vector<1x64x128xbf16>
    %45 = vector.shape_cast %44 : vector<1x64x128xbf16> to vector<64x128xbf16>
    %cst_43 = arith.constant dense<0.000000e+00> : vector<192x128xf32>
    %46 = tpu.matmul %43, %45, %cst_43 {dimension_numbers = #tpu.dot_dimension_numbers<[1], [0], [0], [1], [0, 0, 1, 1], [], []>} : vector<192x64xbf16>, vector<64x128xbf16>, vector<192x128xf32> -> vector<192x128xf32>
    %47 = arith.addf %41, %46 : vector<192x128xf32>
    %c0_44 = arith.constant 0 : index
    %c34 = arith.constant 34 : index
    %c0_45 = arith.constant 0 : index
    %48 = vector.load %arg2[%c0_44, %c34, %c0_45] : memref<1x240x64xbf16, #tpu.memory_space<vmem>>, vector<1x192x64xbf16>
    %49 = vector.shape_cast %48 : vector<1x192x64xbf16> to vector<192x64xbf16>
    %c8 = arith.constant 8 : index
    %c0_46 = arith.constant 0 : index
    %c0_47 = arith.constant 0 : index
    %50 = vector.load %arg3[%c8, %c0_46, %c0_47] : memref<9x64x128xbf16, #tpu.memory_space<vmem>>, vector<1x64x128xbf16>
    %51 = vector.shape_cast %50 : vector<1x64x128xbf16> to vector<64x128xbf16>
    %cst_48 = arith.constant dense<0.000000e+00> : vector<192x128xf32>
    %52 = tpu.matmul %49, %51, %cst_48 {dimension_numbers = #tpu.dot_dimension_numbers<[1], [0], [0], [1], [0, 0, 1, 1], [], []>} : vector<192x64xbf16>, vector<64x128xbf16>, vector<192x128xf32> -> vector<192x128xf32>
    %53 = arith.addf %47, %52 : vector<192x128xf32>
    %54 = vector.broadcast %0 : vector<1x128xf32> to vector<192x128xf32>
    %55 = arith.addf %53, %54 : vector<192x128xf32>
    %56 = arith.truncf %55 : vector<192x128xf32> to vector<192x128xbf16>
    %57 = vector.extract_strided_slice %56 {offsets = [0, 0], sizes = [10, 128], strides = [1, 1]} : vector<192x128xbf16> to vector<10x128xbf16>
    %c0_49 = arith.constant 0 : index
    %c0_50 = arith.constant 0 : index
    %c0_51 = arith.constant 0 : index
    %c0_52 = arith.constant 0 : index
    %58 = vector.load %arg5[%c0_49, %c0_50, %c0_51, %c0_52] : memref<1x12x10x128xbf16, #tpu.memory_space<vmem>>, vector<1x1x10x128xbf16>
    %59 = vector.shape_cast %58 : vector<1x1x10x128xbf16> to vector<10x128xbf16>
    %60 = vector.shape_cast %57 : vector<10x128xbf16> to vector<1x1x10x128xbf16>
    tpu.vector_store %arg5[%c0_49, %c0_50, %c0_51, %c0_52], %60 {strides = array<i32>} : memref<1x12x10x128xbf16, #tpu.memory_space<vmem>>, vector<1x1x10x128xbf16>,
    %61 = vector.extract_strided_slice %56 {offsets = [16, 0], sizes = [10, 128], strides = [1, 1]} : vector<192x128xbf16> to vector<10x128xbf16>
    %c0_53 = arith.constant 0 : index
    %c1_54 = arith.constant 1 : index
    %c0_55 = arith.constant 0 : index
    %c0_56 = arith.constant 0 : index
    %62 = vector.load %arg5[%c0_53, %c1_54, %c0_55, %c0_56] : memref<1x12x10x128xbf16, #tpu.memory_space<vmem>>, vector<1x1x10x128xbf16>
    %63 = vector.shape_cast %62 : vector<1x1x10x128xbf16> to vector<10x128xbf16>
    %64 = vector.shape_cast %61 : vector<10x128xbf16> to vector<1x1x10x128xbf16>
    tpu.vector_store %arg5[%c0_53, %c1_54, %c0_55, %c0_56], %64 {strides = array<i32>} : memref<1x12x10x128xbf16, #tpu.memory_space<vmem>>, vector<1x1x10x128xbf16>,
    %65 = vector.extract_strided_slice %56 {offsets = [32, 0], sizes = [10, 128], strides = [1, 1]} : vector<192x128xbf16> to vector<10x128xbf16>
    %c0_57 = arith.constant 0 : index
    %c2_58 = arith.constant 2 : index
    %c0_59 = arith.constant 0 : index
    %c0_60 = arith.constant 0 : index
    %66 = vector.load %arg5[%c0_57, %c2_58, %c0_59, %c0_60] : memref<1x12x10x128xbf16, #tpu.memory_space<vmem>>, vector<1x1x10x128xbf16>
    %67 = vector.shape_cast %66 : vector<1x1x10x128xbf16> to vector<10x128xbf16>
    %68 = vector.shape_cast %65 : vector<10x128xbf16> to vector<1x1x10x128xbf16>
    tpu.vector_store %arg5[%c0_57, %c2_58, %c0_59, %c0_60], %68 {strides = array<i32>} : memref<1x12x10x128xbf16, #tpu.memory_space<vmem>>, vector<1x1x10x128xbf16>,
    %69 = vector.extract_strided_slice %56 {offsets = [48, 0], sizes = [10, 128], strides = [1, 1]} : vector<192x128xbf16> to vector<10x128xbf16>
    %c0_61 = arith.constant 0 : index
    %c3_62 = arith.constant 3 : index
    %c0_63 = arith.constant 0 : index
    %c0_64 = arith.constant 0 : index
    %70 = vector.load %arg5[%c0_61, %c3_62, %c0_63, %c0_64] : memref<1x12x10x128xbf16, #tpu.memory_space<vmem>>, vector<1x1x10x128xbf16>
    %71 = vector.shape_cast %70 : vector<1x1x10x128xbf16> to vector<10x128xbf16>
    %72 = vector.shape_cast %69 : vector<10x128xbf16> to vector<1x1x10x128xbf16>
    tpu.vector_store %arg5[%c0_61, %c3_62, %c0_63, %c0_64], %72 {strides = array<i32>} : memref<1x12x10x128xbf16, #tpu.memory_space<vmem>>, vector<1x1x10x128xbf16>,
    %73 = vector.extract_strided_slice %56 {offsets = [64, 0], sizes = [10, 128], strides = [1, 1]} : vector<192x128xbf16> to vector<10x128xbf16>
    %c0_65 = arith.constant 0 : index
    %c4_66 = arith.constant 4 : index
    %c0_67 = arith.constant 0 : index
    %c0_68 = arith.constant 0 : index
    %74 = vector.load %arg5[%c0_65, %c4_66, %c0_67, %c0_68] : memref<1x12x10x128xbf16, #tpu.memory_space<vmem>>, vector<1x1x10x128xbf16>
    %75 = vector.shape_cast %74 : vector<1x1x10x128xbf16> to vector<10x128xbf16>
    %76 = vector.shape_cast %73 : vector<10x128xbf16> to vector<1x1x10x128xbf16>
    tpu.vector_store %arg5[%c0_65, %c4_66, %c0_67, %c0_68], %76 {strides = array<i32>} : memref<1x12x10x128xbf16, #tpu.memory_space<vmem>>, vector<1x1x10x128xbf16>,
    %77 = vector.extract_strided_slice %56 {offsets = [80, 0], sizes = [10, 128], strides = [1, 1]} : vector<192x128xbf16> to vector<10x128xbf16>
    %c0_69 = arith.constant 0 : index
    %c5_70 = arith.constant 5 : index
    %c0_71 = arith.constant 0 : index
    %c0_72 = arith.constant 0 : index
    %78 = vector.load %arg5[%c0_69, %c5_70, %c0_71, %c0_72] : memref<1x12x10x128xbf16, #tpu.memory_space<vmem>>, vector<1x1x10x128xbf16>
    %79 = vector.shape_cast %78 : vector<1x1x10x128xbf16> to vector<10x128xbf16>
    %80 = vector.shape_cast %77 : vector<10x128xbf16> to vector<1x1x10x128xbf16>
    tpu.vector_store %arg5[%c0_69, %c5_70, %c0_71, %c0_72], %80 {strides = array<i32>} : memref<1x12x10x128xbf16, #tpu.memory_space<vmem>>, vector<1x1x10x128xbf16>,
    %81 = vector.extract_strided_slice %56 {offsets = [96, 0], sizes = [10, 128], strides = [1, 1]} : vector<192x128xbf16> to vector<10x128xbf16>
    %c0_73 = arith.constant 0 : index
    %c6_74 = arith.constant 6 : index
    %c0_75 = arith.constant 0 : index
    %c0_76 = arith.constant 0 : index
    %82 = vector.load %arg5[%c0_73, %c6_74, %c0_75, %c0_76] : memref<1x12x10x128xbf16, #tpu.memory_space<vmem>>, vector<1x1x10x128xbf16>
    %83 = vector.shape_cast %82 : vector<1x1x10x128xbf16> to vector<10x128xbf16>
    %84 = vector.shape_cast %81 : vector<10x128xbf16> to vector<1x1x10x128xbf16>
    tpu.vector_store %arg5[%c0_73, %c6_74, %c0_75, %c0_76], %84 {strides = array<i32>} : memref<1x12x10x128xbf16, #tpu.memory_space<vmem>>, vector<1x1x10x128xbf16>,
    %85 = vector.extract_strided_slice %56 {offsets = [112, 0], sizes = [10, 128], strides = [1, 1]} : vector<192x128xbf16> to vector<10x128xbf16>
    %c0_77 = arith.constant 0 : index
    %c7_78 = arith.constant 7 : index
    %c0_79 = arith.constant 0 : index
    %c0_80 = arith.constant 0 : index
    %86 = vector.load %arg5[%c0_77, %c7_78, %c0_79, %c0_80] : memref<1x12x10x128xbf16, #tpu.memory_space<vmem>>, vector<1x1x10x128xbf16>
    %87 = vector.shape_cast %86 : vector<1x1x10x128xbf16> to vector<10x128xbf16>
    %88 = vector.shape_cast %85 : vector<10x128xbf16> to vector<1x1x10x128xbf16>
    tpu.vector_store %arg5[%c0_77, %c7_78, %c0_79, %c0_80], %88 {strides = array<i32>} : memref<1x12x10x128xbf16, #tpu.memory_space<vmem>>, vector<1x1x10x128xbf16>,
    %89 = vector.extract_strided_slice %56 {offsets = [128, 0], sizes = [10, 128], strides = [1, 1]} : vector<192x128xbf16> to vector<10x128xbf16>
    %c0_81 = arith.constant 0 : index
    %c8_82 = arith.constant 8 : index
    %c0_83 = arith.constant 0 : index
    %c0_84 = arith.constant 0 : index
    %90 = vector.load %arg5[%c0_81, %c8_82, %c0_83, %c0_84] : memref<1x12x10x128xbf16, #tpu.memory_space<vmem>>, vector<1x1x10x128xbf16>
    %91 = vector.shape_cast %90 : vector<1x1x10x128xbf16> to vector<10x128xbf16>
    %92 = vector.shape_cast %89 : vector<10x128xbf16> to vector<1x1x10x128xbf16>
    tpu.vector_store %arg5[%c0_81, %c8_82, %c0_83, %c0_84], %92 {strides = array<i32>} : memref<1x12x10x128xbf16, #tpu.memory_space<vmem>>, vector<1x1x10x128xbf16>,
    %93 = vector.extract_strided_slice %56 {offsets = [144, 0], sizes = [10, 128], strides = [1, 1]} : vector<192x128xbf16> to vector<10x128xbf16>
    %c0_85 = arith.constant 0 : index
    %c9 = arith.constant 9 : index
    %c0_86 = arith.constant 0 : index
    %c0_87 = arith.constant 0 : index
    %94 = vector.load %arg5[%c0_85, %c9, %c0_86, %c0_87] : memref<1x12x10x128xbf16, #tpu.memory_space<vmem>>, vector<1x1x10x128xbf16>
    %95 = vector.shape_cast %94 : vector<1x1x10x128xbf16> to vector<10x128xbf16>
    %96 = vector.shape_cast %93 : vector<10x128xbf16> to vector<1x1x10x128xbf16>
    tpu.vector_store %arg5[%c0_85, %c9, %c0_86, %c0_87], %96 {strides = array<i32>} : memref<1x12x10x128xbf16, #tpu.memory_space<vmem>>, vector<1x1x10x128xbf16>,
    %97 = vector.extract_strided_slice %56 {offsets = [160, 0], sizes = [10, 128], strides = [1, 1]} : vector<192x128xbf16> to vector<10x128xbf16>
    %c0_88 = arith.constant 0 : index
    %c10 = arith.constant 10 : index
    %c0_89 = arith.constant 0 : index
    %c0_90 = arith.constant 0 : index
    %98 = vector.load %arg5[%c0_88, %c10, %c0_89, %c0_90] : memref<1x12x10x128xbf16, #tpu.memory_space<vmem>>, vector<1x1x10x128xbf16>
    %99 = vector.shape_cast %98 : vector<1x1x10x128xbf16> to vector<10x128xbf16>
    %100 = vector.shape_cast %97 : vector<10x128xbf16> to vector<1x1x10x128xbf16>
    tpu.vector_store %arg5[%c0_88, %c10, %c0_89, %c0_90], %100 {strides = array<i32>} : memref<1x12x10x128xbf16, #tpu.memory_space<vmem>>, vector<1x1x10x128xbf16>,
    %101 = vector.extract_strided_slice %56 {offsets = [176, 0], sizes = [10, 128], strides = [1, 1]} : vector<192x128xbf16> to vector<10x128xbf16>
    %c0_91 = arith.constant 0 : index
    %c11 = arith.constant 11 : index
    %c0_92 = arith.constant 0 : index
    %c0_93 = arith.constant 0 : index
    %102 = vector.load %arg5[%c0_91, %c11, %c0_92, %c0_93] : memref<1x12x10x128xbf16, #tpu.memory_space<vmem>>, vector<1x1x10x128xbf16>
    %103 = vector.shape_cast %102 : vector<1x1x10x128xbf16> to vector<10x128xbf16>
    %104 = vector.shape_cast %101 : vector<10x128xbf16> to vector<1x1x10x128xbf16>
    tpu.vector_store %arg5[%c0_91, %c11, %c0_92, %c0_93], %104 {strides = array<i32>} : memref<1x12x10x128xbf16, #tpu.memory_space<vmem>>, vector<1x1x10x128xbf16>,
    return
  }
  func.func @transform_0(%arg0: i32, %arg1: i32) -> (i32, i32, i32) {
    %c0_i32 = arith.constant 0 : i32
    %c0_i32_0 = arith.constant 0 : i32
    %c0_i32_1 = arith.constant 0 : i32
    return %arg0, %c0_i32, %c0_i32_0 : i32, i32, i32
  }
  func.func @transform_1(%arg0: i32, %arg1: i32) -> (i32, i32, i32) {
    %c0_i32 = arith.constant 0 : i32
    %c0_i32_0 = arith.constant 0 : i32
    %c0_i32_1 = arith.constant 0 : i32
    return %c0_i32, %c0_i32_0, %arg1 : i32, i32, i32
  }
  func.func @transform_2(%arg0: i32, %arg1: i32) -> (i32, i32) {
    %c0_i32 = arith.constant 0 : i32
    %c0_i32_0 = arith.constant 0 : i32
    return %c0_i32, %arg1 : i32, i32
  }
  func.func @transform_3(%arg0: i32, %arg1: i32) -> (i32, i32, i32, i32) {
    %c0_i32 = arith.constant 0 : i32
    %c0_i32_0 = arith.constant 0 : i32
    %c0_i32_1 = arith.constant 0 : i32
    return %arg0, %c0_i32, %c0_i32_0, %arg1 : i32, i32, i32, i32
  }
}

</mosaic_0001>

<llo_original>
// kernel: tpu_custom_call.1
$region0: #{tpu_custom_call.1}
  #allocation0 [shape = 'u32[]', space=smem, size = 0x4, offset = 0x4, fixed_abs, tag = 'smem constant byte address 0x4 - core index']
  #allocation1 [shape = 'u32[144,128]{1,0:T(1,128)}', space=vmem, size = 0x12000, scoped, tag = 'internal scratch']
  %s0 = inlined_call_operand.vmem [shape: bf16[1,240,64], index: 0, kind: input, shape index: {}]
  %s1 = inlined_call_operand.hbm [shape: bf16[9,64,128], index: 1, kind: input, shape index: {}]
  %s2 = inlined_call_operand.vmem [shape: f32[1,128], index: 2, kind: input, shape index: {}]
  %s3 = inlined_call_operand.vmem [shape: bf16[1,12,10,128], index: 3, kind: output, shape index: {}]
  %s4 = sld [smem:[#allocation0]]
  $region26: #{tpu_custom_call.1} parent=0
    _
  %s6 = ssub.s32 1, %s4
  %s7 = scalar_select 0, %s6, %s4
  $region1: #{tpu_custom_call.1} parent=0
    #allocation2 [shape = 'u8[147456]{0}', space=vmem, size = 0x24000, scoped, tag = 'input window, operand 1, single buffered']
    #allocation3 [shape = 's32[1]{0}', space=sflag, size = 0x4, scoped, tag = 'scoped memory for tpu_custom_call.1']
    %8 = vsyncpa [#allocation3], 0
    // Predicated region
    $region2: #{tpu_custom_call.1} parent=1 // pred_check
      _
    $region3: #{tpu_custom_call.1} parent=1 // pred_check_branch
      %10 = sbr.rel (0) target = $region5
    $region4: #{tpu_custom_call.1} parent=1 // pred_region
      _
    $region5: #{tpu_custom_call.1} parent=1 // pred_fallthru
      _
    // Predicated region
    $region6: #{tpu_custom_call.1} parent=1 // pred_check
      _
    $region7: #{tpu_custom_call.1} parent=1 // pred_check_branch
      %12 = sbr.rel (0) target = $region9
    $region8: #{tpu_custom_call.1} parent=1 // pred_region
      %s14 = ssub.s32 4608, 4608
      %15 = vsyncadd [#allocation3], %s14
      %s16 = sshll.u32 [#allocation2], 4
      %s17 = int_to_ptr.vmem [resolvable:$true] %s16
      %22 = dma.hbm_to_vmem [thread:$0]  %s1, 4608, %s17, [#allocation3], 64, 64, 4
    $region9: #{tpu_custom_call.1} parent=1 // pred_fallthru
      _
    // Predicated region
    $region10: #{tpu_custom_call.1} parent=1 // pred_check
      _
    $region11: #{tpu_custom_call.1} parent=1 // pred_check_branch
      %24 = sbr.rel (0) target = $region13
    $region12: #{tpu_custom_call.1} parent=1 // pred_region
      _
    $region13: #{tpu_custom_call.1} parent=1 // pred_fallthru
      _
    // Predicated region
    $region14: #{tpu_custom_call.1} parent=1 // pred_check
      _
    $region15: #{tpu_custom_call.1} parent=1 // pred_check_branch
      %26 = sbr.rel (0) target = $region17
    $region16: #{tpu_custom_call.1} parent=1 // pred_region
      %27 = dma.done [#allocation3], 4608
    $region17: #{tpu_custom_call.1} parent=1 // pred_fallthru
      _
    %v29 = vld [vmem:[%s2] sm:$0x1]
    %v30 = vld [vmem:[%s0] sm:$0xf]
    %v31 = vld [vmem:[%s0 + $0x4] sm:$0xf]
    %v32 = vld [vmem:[%s0 + $0x8] sm:$0xf]
    %v33 = vld [vmem:[%s0 + $0xc] sm:$0xf]
    %v34 = vld [vmem:[%s0 + $0x10] sm:$0xf]
    %v35 = vld [vmem:[%s0 + $0x14] sm:$0xf]
    %v36 = vld [vmem:[%s0 + $0x18] sm:$0xf]
    %v37 = vld [vmem:[%s0 + $0x1c] sm:$0xf]
    %v38 = vld [vmem:[%s0 + $0x20] sm:$0xf]
    %v39 = vld [vmem:[%s0 + $0x24] sm:$0xf]
    %v40 = vld [vmem:[%s0 + $0x28] sm:$0xf]
    %v41 = vld [vmem:[%s0 + $0x2c] sm:$0xf]
    %v42 = vld [vmem:[%s0 + $0x30] sm:$0xf]
    %v43 = vld [vmem:[%s0 + $0x34] sm:$0xf]
    %v44 = vld [vmem:[%s0 + $0x38] sm:$0xf]
    %v45 = vld [vmem:[%s0 + $0x3c] sm:$0xf]
    %v46 = vld [vmem:[%s0 + $0x40] sm:$0xf]
    %v47 = vld [vmem:[%s0 + $0x44] sm:$0xf]
    %v48 = vld [vmem:[%s0 + $0x48] sm:$0xf]
    %v49 = vld [vmem:[%s0 + $0x4c] sm:$0xf]
    %v50 = vld [vmem:[%s0 + $0x50] sm:$0xf]
    %v51 = vld [vmem:[%s0 + $0x54] sm:$0xf]
    %v52 = vld [vmem:[%s0 + $0x58] sm:$0xf]
    %v53 = vld [vmem:[%s0 + $0x5c] sm:$0xf]
    %v54 = vld [vmem:[#allocation2] sm:$0xf]
    %v55 = vld [vmem:[#allocation2 + $0x4] sm:$0xf]
    %v56 = vld [vmem:[#allocation2 + $0x8] sm:$0xf]
    %v57 = vld [vmem:[#allocation2 + $0xc] sm:$0xf]
    %v58 = vld [vmem:[#allocation2 + $0x10] sm:$0xf]
    %v59 = vld [vmem:[#allocation2 + $0x14] sm:$0xf]
    %v60 = vld [vmem:[#allocation2 + $0x18] sm:$0xf]
    %v61 = vld [vmem:[#allocation2 + $0x1c] sm:$0xf]
    %v62 = vld [vmem:[%s0 + $0x60] sm:$0x1]
    %s63 = scalar_lea.vmem [#allocation2], 32
    %v64 = vld [vmem:[%s63] sm:$0xf]
    %v65 = vld [vmem:[%s63 + $0x4] sm:$0xf]
    %v66 = vld [vmem:[%s63 + $0x8] sm:$0xf]
    %v67 = vld [vmem:[%s63 + $0xc] sm:$0xf]
    %v68 = vld [vmem:[%s63 + $0x10] sm:$0xf]
    %v69 = vld [vmem:[%s63 + $0x14] sm:$0xf]
    %v70 = vld [vmem:[%s63 + $0x18] sm:$0xf]
    %v71 = vld [vmem:[%s63 + $0x1c] sm:$0xf]
    %v97 = vunpack.c.l.b16 %v30
    %v98 = vunpack.c.l.b16 %v31
    %v99 = vunpack.c.l.b16 %v32
    %v100 = vunpack.c.l.b16 %v33
    %v101 = vunpack.c.l.b16 %v34
    %v102 = vunpack.c.l.b16 %v35
    %v103 = vunpack.c.l.b16 %v36
    %v104 = vunpack.c.l.b16 %v37
    %v105 = vunpack.c.l.b16 %v38
    %v106 = vunpack.c.l.b16 %v39
    %v107 = vunpack.c.l.b16 %v40
    %v108 = vunpack.c.l.b16 %v41
    %v109 = vunpack.c.l.b16 %v42
    %v110 = vunpack.c.l.b16 %v43
    %v111 = vunpack.c.l.b16 %v44
    %v112 = vunpack.c.l.b16 %v45
    %v113 = vunpack.c.l.b16 %v46
    %v114 = vunpack.c.l.b16 %v47
    %v115 = vunpack.c.l.b16 %v48
    %v116 = vunpack.c.l.b16 %v49
    %v117 = vunpack.c.l.b16 %v50
    %v118 = vunpack.c.l.b16 %v51
    %v119 = vunpack.c.l.b16 %v52
    %v120 = vunpack.c.l.b16 %v53
    %v121 = vunpack.c.l.b16 %v62
    %v122 = vpack.c.b16 %v98, %v97
    %v123 = vpack.c.b16 %v100, %v99
    %v124 = vpack.c.b16 %v102, %v101
    %v125 = vpack.c.b16 %v104, %v103
    %v126 = vpack.c.b16 %v106, %v105
    %v127 = vpack.c.b16 %v108, %v107
    %v128 = vpack.c.b16 %v110, %v109
    %v129 = vpack.c.b16 %v112, %v111
    %v130 = vpack.c.b16 %v114, %v113
    %v131 = vpack.c.b16 %v116, %v115
    %v132 = vpack.c.b16 %v118, %v117
    %v133 = vpack.c.b16 %v120, %v119
    %v134 = vpack.c.b16 %v121, %v121
    %vm135 = vsmask.f32 7424
    %v137 = vshrl.u32 %v122, 16
    %v139 = vshll.u32 %v122, 16
    %v141 = vrot.slane %v139, 1
    %v142 = vor.u32 %v137, %v141
    %v144 = vshll.u32 %v123, 16
    %v146 = vrot.slane %v144, 1
    %v147 = vsel %vm135, %v142, %v146
    %v148 = vshrl.u32 %v123, 16
    %v150 = vor.u32 %v148, %v146
    %v152 = vshll.u32 %v124, 16
    %v154 = vrot.slane %v152, 1
    %v155 = vsel %vm135, %v150, %v154
    %v156 = vshrl.u32 %v124, 16
    %v158 = vor.u32 %v156, %v154
    %v160 = vshll.u32 %v125, 16
    %v162 = vrot.slane %v160, 1
    %v163 = vsel %vm135, %v158, %v162
    %v164 = vshrl.u32 %v125, 16
    %v166 = vor.u32 %v164, %v162
    %v168 = vshll.u32 %v126, 16
    %v170 = vrot.slane %v168, 1
    %v171 = vsel %vm135, %v166, %v170
    %v172 = vshrl.u32 %v126, 16
    %v174 = vor.u32 %v172, %v170
    %v176 = vshll.u32 %v127, 16
    %v178 = vrot.slane %v176, 1
    %v179 = vsel %vm135, %v174, %v178
    %v180 = vshrl.u32 %v127, 16
    %v182 = vor.u32 %v180, %v178
    %v184 = vshll.u32 %v128, 16
    %v186 = vrot.slane %v184, 1
    %v187 = vsel %vm135, %v182, %v186
    %v188 = vshrl.u32 %v128, 16
    %v190 = vor.u32 %v188, %v186
    %v192 = vshll.u32 %v129, 16
    %v194 = vrot.slane %v192, 1
    %v195 = vsel %vm135, %v190, %v194
    %v196 = vshrl.u32 %v129, 16
    %v198 = vor.u32 %v196, %v194
    %v200 = vshll.u32 %v130, 16
    %v202 = vrot.slane %v200, 1
    %v203 = vsel %vm135, %v198, %v202
    %v204 = vshrl.u32 %v130, 16
    %v206 = vor.u32 %v204, %v202
    %v208 = vshll.u32 %v131, 16
    %v210 = vrot.slane %v208, 1
    %v211 = vsel %vm135, %v206, %v210
    %v212 = vshrl.u32 %v131, 16
    %v214 = vor.u32 %v212, %v210
    %v216 = vshll.u32 %v132, 16
    %v218 = vrot.slane %v216, 1
    %v219 = vsel %vm135, %v214, %v218
    %v220 = vshrl.u32 %v132, 16
    %v222 = vor.u32 %v220, %v218
    %v224 = vshll.u32 %v133, 16
    %v226 = vrot.slane %v224, 1
    %v227 = vsel %vm135, %v222, %v226
    %v228 = vshrl.u32 %v133, 16
    %v230 = vor.u32 %v228, %v226
    %v232 = vshll.u32 %v134, 16
    %v234 = vrot.slane %v232, 1
    %v235 = vsel %vm135, %v230, %v234
    %v244 = vunpack.c.l.b16 %v64
    %v245 = vunpack.c.l.b16 %v65
    %v246 = vunpack.c.l.b16 %v66
    %v247 = vunpack.c.l.b16 %v67
    %v248 = vunpack.c.l.b16 %v68
    %v249 = vunpack.c.l.b16 %v69
    %v250 = vunpack.c.l.b16 %v70
    %v251 = vunpack.c.l.b16 %v71
    %v252 = vpack.c.b16 %v245, %v244
    %v253 = vpack.c.b16 %v247, %v246
    %v254 = vpack.c.b16 %v249, %v248
    %v255 = vpack.c.b16 %v251, %v250
    %vm260 = vcmask 523264
    %v262 = vsel %vm260, %v147, 0
    %v265 = vsel %vm260, %v155, 0
    %v268 = vsel %vm260, %v163, 0
    %v271 = vsel %vm260, %v171, 0
    %v274 = vsel %vm260, %v179, 0
    %v277 = vsel %vm260, %v187, 0
    %v280 = vsel %vm260, %v195, 0
    %v283 = vsel %vm260, %v203, 0
    %v286 = vsel %vm260, %v211, 0
    %v289 = vsel %vm260, %v219, 0
    %v292 = vsel %vm260, %v227, 0
    %v295 = vsel %vm260, %v235, 0
    %297 = vmatprep.subr.bf16.mxu0 0
    %298 = vmatpush1.bf16.msra.mxu0 0
    %299 = vmatprep.subr.bf16.mxu0 0
    %300 = vmatpush1.bf16.msra.mxu0 0
    %301 = vmatprep.subr.bf16.mxu0 0
    %302 = vmatpush1.bf16.msra.mxu0 0
    %303 = vmatprep.subr.bf16.mxu0 0
    %304 = vmatpush1.bf16.msra.mxu0 0
    %305 = vmatprep.subr.bf16.mxu0 0
    %306 = vmatpush1.bf16.msra.mxu0 %v255
    %307 = vmatprep.subr.bf16.mxu0 0
    %308 = vmatpush1.bf16.msra.mxu0 %v254
    %309 = vmatprep.subr.bf16.mxu0 0
    %310 = vmatpush1.bf16.msra.mxu0 %v253
    %311 = vmatprep.subr.bf16.mxu0 0
    %312 = vmatpush1.bf16.msra.mxu0 %v252
    %313 = vmatprep.subr.bf16.mxu0 0
    %314 = vmatpush2.bf16.msra.mxu0 0
    %315 = vmatprep.subr.bf16.mxu0 0
    %316 = vmatpush2.bf16.msra.mxu0 0
    %317 = vmatprep.subr.bf16.mxu0 0
    %318 = vmatpush2.bf16.msra.mxu0 0
    %319 = vmatprep.subr.bf16.mxu0 0
    %320 = vmatpush2.bf16.msra.mxu0 0
    %321 = vmatprep.subr.bf16.mxu0 0
    %322 = vmatpush2.bf16.msra.mxu0 0
    %323 = vmatprep.subr.bf16.mxu0 0
    %324 = vmatpush2.bf16.msra.mxu0 0
    %325 = vmatprep.subr.bf16.mxu0 0
    %326 = vmatpush2.bf16.msra.mxu0 0
    %327 = vmatprep.subr.bf16.mxu0 0
    %328 = vmatpush2.bf16.msra.mxu0 0
    %329 = vmatprep.mubr.bf16.mxu0 0
    %330 = vmatmul.mubr.bf16.gmra.mxu0 %v262
    %v331 = vpop.f32.mrf.mxu0
    %v332 = vadd.f32 0.0, %v331
    %v333 = vpop.f32.mrf.mxu0
    %v334 = vpop.f32.mrf.mxu0
    %v335 = vadd.f32 0.0, %v334
    %v336 = vpop.f32.mrf.mxu0
    %337 = vmatprep.mubr.bf16.mxu0 0
    %338 = vmatmul.mubr.bf16.gmra.mxu0 %v265
    %v339 = vpop.f32.mrf.mxu0
    %v340 = vadd.f32 0.0, %v339
    %v341 = vpop.f32.mrf.mxu0
    %v342 = vpop.f32.mrf.mxu0
    %v343 = vadd.f32 0.0, %v342
    %v344 = vpop.f32.mrf.mxu0
    %345 = vmatprep.mubr.bf16.mxu0 0
    %346 = vmatmul.mubr.bf16.gmra.mxu0 %v268
    %v347 = vpop.f32.mrf.mxu0
    %v348 = vadd.f32 0.0, %v347
    %v349 = vpop.f32.mrf.mxu0
    %v350 = vpop.f32.mrf.mxu0
    %v351 = vadd.f32 0.0, %v350
    %v352 = vpop.f32.mrf.mxu0
    %353 = vmatprep.mubr.bf16.mxu0 0
    %354 = vmatmul.mubr.bf16.gmra.mxu0 %v271
    %v355 = vpop.f32.mrf.mxu0
    %v356 = vadd.f32 0.0, %v355
    %v357 = vpop.f32.mrf.mxu0
    %v358 = vpop.f32.mrf.mxu0
    %v359 = vadd.f32 0.0, %v358
    %v360 = vpop.f32.mrf.mxu0
    %361 = vmatprep.mubr.bf16.mxu0 0
    %362 = vmatmul.mubr.bf16.gmra.mxu0 %v274
    %v363 = vpop.f32.mrf.mxu0
    %v364 = vadd.f32 0.0, %v363
    %v365 = vpop.f32.mrf.mxu0
    %v366 = vpop.f32.mrf.mxu0
    %v367 = vadd.f32 0.0, %v366
    %v368 = vpop.f32.mrf.mxu0
    %369 = vmatprep.mubr.bf16.mxu0 0
    %370 = vmatmul.mubr.bf16.gmra.mxu0 %v277
    %v371 = vpop.f32.mrf.mxu0
    %v372 = vadd.f32 0.0, %v371
    %v373 = vpop.f32.mrf.mxu0
    %v374 = vpop.f32.mrf.mxu0
    %v375 = vadd.f32 0.0, %v374
    %v376 = vpop.f32.mrf.mxu0
    %377 = vmatprep.mubr.bf16.mxu0 0
    %378 = vmatmul.mubr.bf16.gmra.mxu0 %v280
    %v379 = vpop.f32.mrf.mxu0
    %v380 = vadd.f32 0.0, %v379
    %v381 = vpop.f32.mrf.mxu0
    %v382 = vpop.f32.mrf.mxu0
    %v383 = vadd.f32 0.0, %v382
    %v384 = vpop.f32.mrf.mxu0
    %385 = vmatprep.mubr.bf16.mxu0 0
    %386 = vmatmul.mubr.bf16.gmra.mxu0 %v283
    %v387 = vpop.f32.mrf.mxu0
    %v388 = vadd.f32 0.0, %v387
    %v389 = vpop.f32.mrf.mxu0
    %v390 = vpop.f32.mrf.mxu0
    %v391 = vadd.f32 0.0, %v390
    %v392 = vpop.f32.mrf.mxu0
    %393 = vmatprep.mubr.bf16.mxu0 0
    %394 = vmatmul.mubr.bf16.gmra.mxu0 %v286
    %v395 = vpop.f32.mrf.mxu0
    %v396 = vadd.f32 0.0, %v395
    %v397 = vpop.f32.mrf.mxu0
    %v398 = vpop.f32.mrf.mxu0
    %v399 = vadd.f32 0.0, %v398
    %v400 = vpop.f32.mrf.mxu0
    %401 = vmatprep.mubr.bf16.mxu0 0
    %402 = vmatmul.mubr.bf16.gmra.mxu0 %v289
    %v403 = vpop.f32.mrf.mxu0
    %v404 = vadd.f32 0.0, %v403
    %v405 = vpop.f32.mrf.mxu0
    %v406 = vpop.f32.mrf.mxu0
    %v407 = vadd.f32 0.0, %v406
    %v408 = vpop.f32.mrf.mxu0
    %409 = vmatprep.mubr.bf16.mxu0 0
    %410 = vmatmul.mubr.bf16.gmra.mxu0 %v292
    %v411 = vpop.f32.mrf.mxu0
    %v412 = vadd.f32 0.0, %v411
    %v413 = vpop.f32.mrf.mxu0
    %v414 = vpop.f32.mrf.mxu0
    %v415 = vadd.f32 0.0, %v414
    %v416 = vpop.f32.mrf.mxu0
    %417 = vmatprep.mubr.bf16.mxu0 0
    %418 = vmatmul.mubr.bf16.gmra.mxu0 %v295
    %v419 = vpop.f32.mrf.mxu0
    %v420 = vadd.f32 0.0, %v419
    %v421 = vpop.f32.mrf.mxu0
    %v422 = vpop.f32.mrf.mxu0
    %v423 = vadd.f32 0.0, %v422
    %v424 = vpop.f32.mrf.mxu0
    %425 = vdwg.mxu0
    %v434 = vunpack.c.l.b16 %v54
    %v435 = vunpack.c.l.b16 %v55
    %v436 = vunpack.c.l.b16 %v56
    %v437 = vunpack.c.l.b16 %v57
    %v438 = vunpack.c.l.b16 %v58
    %v439 = vunpack.c.l.b16 %v59
    %v440 = vunpack.c.l.b16 %v60
    %v441 = vunpack.c.l.b16 %v61
    %v442 = vpack.c.b16 %v435, %v434
    %v443 = vpack.c.b16 %v437, %v436
    %v444 = vpack.c.b16 %v439, %v438
    %v445 = vpack.c.b16 %v441, %v440
    %v450 = vsel %vm260, %v122, 0
    %v452 = vsel %vm260, %v123, 0
    %v454 = vsel %vm260, %v124, 0
    %v456 = vsel %vm260, %v125, 0
    %v458 = vsel %vm260, %v126, 0
    %v460 = vsel %vm260, %v127, 0
    %v462 = vsel %vm260, %v128, 0
    %v464 = vsel %vm260, %v129, 0
    %v466 = vsel %vm260, %v130, 0
    %v468 = vsel %vm260, %v131, 0
    %v470 = vsel %vm260, %v132, 0
    %v472 = vsel %vm260, %v133, 0
    %474 = vmatprep.subr.bf16.mxu0 0
    %475 = vmatpush1.bf16.msra.mxu0 0
    %476 = vmatprep.subr.bf16.mxu0 0
    %477 = vmatpush1.bf16.msra.mxu0 0
    %478 = vmatprep.subr.bf16.mxu0 0
    %479 = vmatpush1.bf16.msra.mxu0 0
    %480 = vmatprep.subr.bf16.mxu0 0
    %481 = vmatpush1.bf16.msra.mxu0 0
    %482 = vmatprep.subr.bf16.mxu0 0
    %483 = vmatpush1.bf16.msra.mxu0 %v445
    %484 = vmatprep.subr.bf16.mxu0 0
    %485 = vmatpush1.bf16.msra.mxu0 %v444
    %486 = vmatprep.subr.bf16.mxu0 0
    %487 = vmatpush1.bf16.msra.mxu0 %v443
    %488 = vmatprep.subr.bf16.mxu0 0
    %489 = vmatpush1.bf16.msra.mxu0 %v442
    %490 = vmatprep.subr.bf16.mxu0 0
    %491 = vmatpush2.bf16.msra.mxu0 0
    %492 = vmatprep.subr.bf16.mxu0 0
    %493 = vmatpush2.bf16.msra.mxu0 0
    %494 = vmatprep.subr.bf16.mxu0 0
    %495 = vmatpush2.bf16.msra.mxu0 0
    %496 = vmatprep.subr.bf16.mxu0 0
    %497 = vmatpush2.bf16.msra.mxu0 0
    %498 = vmatprep.subr.bf16.mxu0 0
    %499 = vmatpush2.bf16.msra.mxu0 0
    %500 = vmatprep.subr.bf16.mxu0 0
    %501 = vmatpush2.bf16.msra.mxu0 0
    %502 = vmatprep.subr.bf16.mxu0 0
    %503 = vmatpush2.bf16.msra.mxu0 0
    %504 = vmatprep.subr.bf16.mxu0 0
    %505 = vmatpush2.bf16.msra.mxu0 0
    %506 = vmatprep.mubr.bf16.mxu0 0
    %507 = vmatmul.mubr.bf16.gmra.mxu0 %v450
    %v508 = vpop.f32.mrf.mxu0
    %v509 = vadd.f32 %v332, %v508
    %v510 = vpop.f32.mrf.mxu0
    %v511 = vpop.f32.mrf.mxu0
    %v512 = vadd.f32 %v335, %v511
    %v513 = vpop.f32.mrf.mxu0
    %514 = vmatprep.mubr.bf16.mxu0 0
    %515 = vmatmul.mubr.bf16.gmra.mxu0 %v452
    %v516 = vpop.f32.mrf.mxu0
    %v517 = vadd.f32 %v340, %v516
    %v518 = vpop.f32.mrf.mxu0
    %v519 = vpop.f32.mrf.mxu0
    %v520 = vadd.f32 %v343, %v519
    %v521 = vpop.f32.mrf.mxu0
    %522 = vmatprep.mubr.bf16.mxu0 0
    %523 = vmatmul.mubr.bf16.gmra.mxu0 %v454
    %v524 = vpop.f32.mrf.mxu0
    %v525 = vadd.f32 %v348, %v524
    %v526 = vpop.f32.mrf.mxu0
    %v527 = vpop.f32.mrf.mxu0
    %v528 = vadd.f32 %v351, %v527
    %v529 = vpop.f32.mrf.mxu0
    %530 = vmatprep.mubr.bf16.mxu0 0
    %531 = vmatmul.mubr.bf16.gmra.mxu0 %v456
    %v532 = vpop.f32.mrf.mxu0
    %v533 = vadd.f32 %v356, %v532
    %v534 = vpop.f32.mrf.mxu0
    %v535 = vpop.f32.mrf.mxu0
    %v536 = vadd.f32 %v359, %v535
    %v537 = vpop.f32.mrf.mxu0
    %538 = vmatprep.mubr.bf16.mxu0 0
    %539 = vmatmul.mubr.bf16.gmra.mxu0 %v458
    %v540 = vpop.f32.mrf.mxu0
    %v541 = vadd.f32 %v364, %v540
    %v542 = vpop.f32.mrf.mxu0
    %v543 = vpop.f32.mrf.mxu0
    %v544 = vadd.f32 %v367, %v543
    %v545 = vpop.f32.mrf.mxu0
    %546 = vmatprep.mubr.bf16.mxu0 0
    %547 = vmatmul.mubr.bf16.gmra.mxu0 %v460
    %v548 = vpop.f32.mrf.mxu0
    %v549 = vadd.f32 %v372, %v548
    %v550 = vpop.f32.mrf.mxu0
    %v551 = vpop.f32.mrf.mxu0
    %v552 = vadd.f32 %v375, %v551
    %v553 = vpop.f32.mrf.mxu0
    %554 = vmatprep.mubr.bf16.mxu0 0
    %555 = vmatmul.mubr.bf16.gmra.mxu0 %v462
    %v556 = vpop.f32.mrf.mxu0
    %v557 = vadd.f32 %v380, %v556
    %v558 = vpop.f32.mrf.mxu0
    %v559 = vpop.f32.mrf.mxu0
    %v560 = vadd.f32 %v383, %v559
    %v561 = vpop.f32.mrf.mxu0
    %562 = vmatprep.mubr.bf16.mxu0 0
    %563 = vmatmul.mubr.bf16.gmra.mxu0 %v464
    %v564 = vpop.f32.mrf.mxu0
    %v565 = vadd.f32 %v388, %v564
    %v566 = vpop.f32.mrf.mxu0
    %v567 = vpop.f32.mrf.mxu0
    %v568 = vadd.f32 %v391, %v567
    %v569 = vpop.f32.mrf.mxu0
    %570 = vmatprep.mubr.bf16.mxu0 0
    %571 = vmatmul.mubr.bf16.gmra.mxu0 %v466
    %v572 = vpop.f32.mrf.mxu0
    %v573 = vadd.f32 %v396, %v572
    %v574 = vpop.f32.mrf.mxu0
    %v575 = vpop.f32.mrf.mxu0
    %v576 = vadd.f32 %v399, %v575
    %v577 = vpop.f32.mrf.mxu0
    %578 = vmatprep.mubr.bf16.mxu0 0
    %579 = vmatmul.mubr.bf16.gmra.mxu0 %v468
    %v580 = vpop.f32.mrf.mxu0
    %v581 = vadd.f32 %v404, %v580
    %v582 = vpop.f32.mrf.mxu0
    %v583 = vpop.f32.mrf.mxu0
    %v584 = vadd.f32 %v407, %v583
    %v585 = vpop.f32.mrf.mxu0
    %586 = vmatprep.mubr.bf16.mxu0 0
    %587 = vmatmul.mubr.bf16.gmra.mxu0 %v470
    %v588 = vpop.f32.mrf.mxu0
    %v589 = vadd.f32 %v412, %v588
    %v590 = vpop.f32.mrf.mxu0
    %v591 = vpop.f32.mrf.mxu0
    %v592 = vadd.f32 %v415, %v591
    %v593 = vpop.f32.mrf.mxu0
    %594 = vmatprep.mubr.bf16.mxu0 0
    %595 = vmatmul.mubr.bf16.gmra.mxu0 %v472
    %v596 = vpop.f32.mrf.mxu0
    %v597 = vadd.f32 %v420, %v596
    %v598 = vpop.f32.mrf.mxu0
    %v599 = vpop.f32.mrf.mxu0
    %v600 = vadd.f32 %v423, %v599
    %v601 = vpop.f32.mrf.mxu0
    %602 = vdwg.mxu0
    %v603 = vld [vmem:[%s0] sm:$0xe]
    %s604 = scalar_lea.vmem [#allocation2], 64
    %v605 = vld [vmem:[%s604] sm:$0xf]
    %v606 = vld [vmem:[%s604 + $0x4] sm:$0xf]
    %v607 = vld [vmem:[%s604 + $0x8] sm:$0xf]
    %v608 = vld [vmem:[%s604 + $0xc] sm:$0xf]
    %v609 = vld [vmem:[%s604 + $0x10] sm:$0xf]
    %v610 = vld [vmem:[%s604 + $0x14] sm:$0xf]
    %v611 = vld [vmem:[%s604 + $0x18] sm:$0xf]
    %v612 = vld [vmem:[%s604 + $0x1c] sm:$0xf]
    %v614 = vunpack.c.l.b16 %v603
    %v615 = vpack.c.b16 %v98, %v614
    %vm616 = vcmask 1046528
    %v617 = vrot.slane %v615, 1
    %v618 = vrot.slane %v123, 1
    %v619 = vsel %vm616, %v617, %v618
    %v620 = vrot.slane %v124, 1
    %v621 = vsel %vm616, %v618, %v620
    %v622 = vrot.slane %v125, 1
    %v623 = vsel %vm616, %v620, %v622
    %v624 = vrot.slane %v126, 1
    %v625 = vsel %vm616, %v622, %v624
    %v626 = vrot.slane %v127, 1
    %v627 = vsel %vm616, %v624, %v626
    %v628 = vrot.slane %v128, 1
    %v629 = vsel %vm616, %v626, %v628
    %v630 = vrot.slane %v129, 1
    %v631 = vsel %vm616, %v628, %v630
    %v632 = vrot.slane %v130, 1
    %v633 = vsel %vm616, %v630, %v632
    %v634 = vrot.slane %v131, 1
    %v635 = vsel %vm616, %v632, %v634
    %v636 = vrot.slane %v132, 1
    %v637 = vsel %vm616, %v634, %v636
    %v638 = vrot.slane %v133, 1
    %v639 = vsel %vm616, %v636, %v638
    %v640 = vrot.slane %v134, 1
    %v641 = vsel %vm616, %v638, %v640
    %v650 = vunpack.c.l.b16 %v605
    %v651 = vunpack.c.l.b16 %v606
    %v652 = vunpack.c.l.b16 %v607
    %v653 = vunpack.c.l.b16 %v608
    %v654 = vunpack.c.l.b16 %v609
    %v655 = vunpack.c.l.b16 %v610
    %v656 = vunpack.c.l.b16 %v611
    %v657 = vunpack.c.l.b16 %v612
    %v658 = vpack.c.b16 %v651, %v650
    %v659 = vpack.c.b16 %v653, %v652
    %v660 = vpack.c.b16 %v655, %v654
    %v661 = vpack.c.b16 %v657, %v656
    %v667 = vsel %vm260, %v619, 0
    %v670 = vsel %vm260, %v621, 0
    %v673 = vsel %vm260, %v623, 0
    %v676 = vsel %vm260, %v625, 0
    %v679 = vsel %vm260, %v627, 0
    %v682 = vsel %vm260, %v629, 0
    %v685 = vsel %vm260, %v631, 0
    %v688 = vsel %vm260, %v633, 0
    %v691 = vsel %vm260, %v635, 0
    %v694 = vsel %vm260, %v637, 0
    %v697 = vsel %vm260, %v639, 0
    %v700 = vsel %vm260, %v641, 0
    %702 = vmatprep.subr.bf16.mxu0 0
    %703 = vmatpush1.bf16.msra.mxu0 0
    %704 = vmatprep.subr.bf16.mxu0 0
    %705 = vmatpush1.bf16.msra.mxu0 0
    %706 = vmatprep.subr.bf16.mxu0 0
    %707 = vmatpush1.bf16.msra.mxu0 0
    %708 = vmatprep.subr.bf16.mxu0 0
    %709 = vmatpush1.bf16.msra.mxu0 0
    %710 = vmatprep.subr.bf16.mxu0 0
    %711 = vmatpush1.bf16.msra.mxu0 %v661
    %712 = vmatprep.subr.bf16.mxu0 0
    %713 = vmatpush1.bf16.msra.mxu0 %v660
    %714 = vmatprep.subr.bf16.mxu0 0
    %715 = vmatpush1.bf16.msra.mxu0 %v659
    %716 = vmatprep.subr.bf16.mxu0 0
    %717 = vmatpush1.bf16.msra.mxu0 %v658
    %718 = vmatprep.subr.bf16.mxu0 0
    %719 = vmatpush2.bf16.msra.mxu0 0
    %720 = vmatprep.subr.bf16.mxu0 0
    %721 = vmatpush2.bf16.msra.mxu0 0
    %722 = vmatprep.subr.bf16.mxu0 0
    %723 = vmatpush2.bf16.msra.mxu0 0
    %724 = vmatprep.subr.bf16.mxu0 0
    %725 = vmatpush2.bf16.msra.mxu0 0
    %726 = vmatprep.subr.bf16.mxu0 0
    %727 = vmatpush2.bf16.msra.mxu0 0
    %728 = vmatprep.subr.bf16.mxu0 0
    %729 = vmatpush2.bf16.msra.mxu0 0
    %730 = vmatprep.subr.bf16.mxu0 0
    %731 = vmatpush2.bf16.msra.mxu0 0
    %732 = vmatprep.subr.bf16.mxu0 0
    %733 = vmatpush2.bf16.msra.mxu0 0
    %734 = vmatprep.mubr.bf16.mxu0 0
    %735 = vmatmul.mubr.bf16.gmra.mxu0 %v667
    %v736 = vpop.f32.mrf.mxu0
    %v737 = vadd.f32 0.0, %v736
    %v738 = vpop.f32.mrf.mxu0
    %v739 = vpop.f32.mrf.mxu0
    %v740 = vadd.f32 0.0, %v739
    %v741 = vpop.f32.mrf.mxu0
    %742 = vmatprep.mubr.bf16.mxu0 0
    %743 = vmatmul.mubr.bf16.gmra.mxu0 %v670
    %v744 = vpop.f32.mrf.mxu0
    %v745 = vadd.f32 0.0, %v744
    %v746 = vpop.f32.mrf.mxu0
    %v747 = vpop.f32.mrf.mxu0
    %v748 = vadd.f32 0.0, %v747
    %v749 = vpop.f32.mrf.mxu0
    %750 = vmatprep.mubr.bf16.mxu0 0
    %751 = vmatmul.mubr.bf16.gmra.mxu0 %v673
    %v752 = vpop.f32.mrf.mxu0
    %v753 = vadd.f32 0.0, %v752
    %v754 = vpop.f32.mrf.mxu0
    %v755 = vpop.f32.mrf.mxu0
    %v756 = vadd.f32 0.0, %v755
    %v757 = vpop.f32.mrf.mxu0
    %758 = vmatprep.mubr.bf16.mxu0 0
    %759 = vmatmul.mubr.bf16.gmra.mxu0 %v676
    %v760 = vpop.f32.mrf.mxu0
    %v761 = vadd.f32 0.0, %v760
    %v762 = vpop.f32.mrf.mxu0
    %v763 = vpop.f32.mrf.mxu0
    %v764 = vadd.f32 0.0, %v763
    %v765 = vpop.f32.mrf.mxu0
    %766 = vmatprep.mubr.bf16.mxu0 0
    %767 = vmatmul.mubr.bf16.gmra.mxu0 %v679
    %v768 = vpop.f32.mrf.mxu0
    %v769 = vadd.f32 0.0, %v768
    %v770 = vpop.f32.mrf.mxu0
    %v771 = vpop.f32.mrf.mxu0
    %v772 = vadd.f32 0.0, %v771
    %v773 = vpop.f32.mrf.mxu0
    %774 = vmatprep.mubr.bf16.mxu0 0
    %775 = vmatmul.mubr.bf16.gmra.mxu0 %v682
    %v776 = vpop.f32.mrf.mxu0
    %v777 = vadd.f32 0.0, %v776
    %v778 = vpop.f32.mrf.mxu0
    %v779 = vpop.f32.mrf.mxu0
    %v780 = vadd.f32 0.0, %v779
    %v781 = vpop.f32.mrf.mxu0
    %782 = vmatprep.mubr.bf16.mxu0 0
    %783 = vmatmul.mubr.bf16.gmra.mxu0 %v685
    %v784 = vpop.f32.mrf.mxu0
    %v785 = vadd.f32 0.0, %v784
    %v786 = vpop.f32.mrf.mxu0
    %v787 = vpop.f32.mrf.mxu0
    %v788 = vadd.f32 0.0, %v787
    %v789 = vpop.f32.mrf.mxu0
    %790 = vmatprep.mubr.bf16.mxu0 0
    %791 = vmatmul.mubr.bf16.gmra.mxu0 %v688
    %v792 = vpop.f32.mrf.mxu0
    %v793 = vadd.f32 0.0, %v792
    %v794 = vpop.f32.mrf.mxu0
    %v795 = vpop.f32.mrf.mxu0
    %v796 = vadd.f32 0.0, %v795
    %v797 = vpop.f32.mrf.mxu0
    %798 = vmatprep.mubr.bf16.mxu0 0
    %799 = vmatmul.mubr.bf16.gmra.mxu0 %v691
    %v800 = vpop.f32.mrf.mxu0
    %v801 = vadd.f32 0.0, %v800
    %v802 = vpop.f32.mrf.mxu0
    %v803 = vpop.f32.mrf.mxu0
    %v804 = vadd.f32 0.0, %v803
    %v805 = vpop.f32.mrf.mxu0
    %806 = vmatprep.mubr.bf16.mxu0 0
    %807 = vmatmul.mubr.bf16.gmra.mxu0 %v694
    %v808 = vpop.f32.mrf.mxu0
    %v809 = vadd.f32 0.0, %v808
    %v810 = vpop.f32.mrf.mxu0
    %v811 = vpop.f32.mrf.mxu0
    %v812 = vadd.f32 0.0, %v811
    %v813 = vpop.f32.mrf.mxu0
    %814 = vmatprep.mubr.bf16.mxu0 0
    %815 = vmatmul.mubr.bf16.gmra.mxu0 %v697
    %v816 = vpop.f32.mrf.mxu0
    %v817 = vadd.f32 0.0, %v816
    %v818 = vpop.f32.mrf.mxu0
    %v819 = vpop.f32.mrf.mxu0
    %v820 = vadd.f32 0.0, %v819
    %v821 = vpop.f32.mrf.mxu0
    %822 = vmatprep.mubr.bf16.mxu0 0
    %823 = vmatmul.mubr.bf16.gmra.mxu0 %v700
    %v824 = vpop.f32.mrf.mxu0
    %v825 = vadd.f32 0.0, %v824
    %v826 = vpop.f32.mrf.mxu0
    %v827 = vpop.f32.mrf.mxu0
    %v828 = vadd.f32 0.0, %v827
    %v829 = vpop.f32.mrf.mxu0
    %830 = vdwg.mxu0
    %v831 = vadd.f32 %v509, %v737
    %v832 = vadd.f32 %v512, %v740
    %v833 = vadd.f32 %v517, %v745
    %v834 = vadd.f32 %v520, %v748
    %v835 = vadd.f32 %v525, %v753
    %v836 = vadd.f32 %v528, %v756
    %v837 = vadd.f32 %v533, %v761
    %v838 = vadd.f32 %v536, %v764
    %v839 = vadd.f32 %v541, %v769
    %v840 = vadd.f32 %v544, %v772
    %v841 = vadd.f32 %v549, %v777
    %v842 = vadd.f32 %v552, %v780
    %v843 = vadd.f32 %v557, %v785
    %v844 = vadd.f32 %v560, %v788
    %v845 = vadd.f32 %v565, %v793
    %v846 = vadd.f32 %v568, %v796
    %v847 = vadd.f32 %v573, %v801
    %v848 = vadd.f32 %v576, %v804
    %v849 = vadd.f32 %v581, %v809
    %v850 = vadd.f32 %v584, %v812
    %v851 = vadd.f32 %v589, %v817
    %v852 = vadd.f32 %v592, %v820
    %v853 = vadd.f32 %v597, %v825
    %v854 = vadd.f32 %v600, %v828
    %v855 = vld [vmem:[%s0 + $0x8] sm:$0xf]
    %v856 = vld [vmem:[%s0 + $0xc] sm:$0xf]
    %v857 = vld [vmem:[%s0 + $0x10] sm:$0xf]
    %v858 = vld [vmem:[%s0 + $0x14] sm:$0xf]
    %v859 = vld [vmem:[%s0 + $0x18] sm:$0xf]
    %v860 = vld [vmem:[%s0 + $0x1c] sm:$0xf]
    %v861 = vld [vmem:[%s0 + $0x20] sm:$0xf]
    %v862 = vld [vmem:[%s0 + $0x24] sm:$0xf]
    %v863 = vld [vmem:[%s0 + $0x28] sm:$0xf]
    %v864 = vld [vmem:[%s0 + $0x2c] sm:$0xf]
    %v865 = vld [vmem:[%s0 + $0x30] sm:$0xf]
    %v866 = vld [vmem:[%s0 + $0x34] sm:$0xf]
    %v867 = vld [vmem:[%s0 + $0x38] sm:$0xf]
    %v868 = vld [vmem:[%s0 + $0x3c] sm:$0xf]
    %v869 = vld [vmem:[%s0 + $0x40] sm:$0xf]
    %v870 = vld [vmem:[%s0 + $0x44] sm:$0xf]
    %v871 = vld [vmem:[%s0 + $0x48] sm:$0xf]
    %v872 = vld [vmem:[%s0 + $0x4c] sm:$0xf]
    %v873 = vld [vmem:[%s0 + $0x50] sm:$0xf]
    %v874 = vld [vmem:[%s0 + $0x54] sm:$0xf]
    %v875 = vld [vmem:[%s0 + $0x58] sm:$0xf]
    %v876 = vld [vmem:[%s0 + $0x5c] sm:$0xf]
    %v877 = vld [vmem:[%s0 + $0x60] sm:$0xf]
    %v878 = vld [vmem:[%s0 + $0x64] sm:$0xf]
    %s879 = scalar_lea.vmem [#allocation2], 96
    %v880 = vld [vmem:[%s879] sm:$0xf]
    %v881 = vld [vmem:[%s879 + $0x4] sm:$0xf]
    %v882 = vld [vmem:[%s879 + $0x8] sm:$0xf]
    %v883 = vld [vmem:[%s879 + $0xc] sm:$0xf]
    %v884 = vld [vmem:[%s879 + $0x10] sm:$0xf]
    %v885 = vld [vmem:[%s879 + $0x14] sm:$0xf]
    %v886 = vld [vmem:[%s879 + $0x18] sm:$0xf]
    %v887 = vld [vmem:[%s879 + $0x1c] sm:$0xf]
    %v912 = vunpack.c.l.b16 %v855
    %v913 = vunpack.c.l.b16 %v856
    %v914 = vunpack.c.l.b16 %v857
    %v915 = vunpack.c.l.b16 %v858
    %v916 = vunpack.c.l.b16 %v859
    %v917 = vunpack.c.l.b16 %v860
    %v918 = vunpack.c.l.b16 %v861
    %v919 = vunpack.c.l.b16 %v862
    %v920 = vunpack.c.l.b16 %v863
    %v921 = vunpack.c.l.b16 %v864
    %v922 = vunpack.c.l.b16 %v865
    %v923 = vunpack.c.l.b16 %v866
    %v924 = vunpack.c.l.b16 %v867
    %v925 = vunpack.c.l.b16 %v868
    %v926 = vunpack.c.l.b16 %v869
    %v927 = vunpack.c.l.b16 %v870
    %v928 = vunpack.c.l.b16 %v871
    %v929 = vunpack.c.l.b16 %v872
    %v930 = vunpack.c.l.b16 %v873
    %v931 = vunpack.c.l.b16 %v874
    %v932 = vunpack.c.l.b16 %v875
    %v933 = vunpack.c.l.b16 %v876
    %v934 = vunpack.c.l.b16 %v877
    %v935 = vunpack.c.l.b16 %v878
    %v936 = vpack.c.b16 %v913, %v912
    %v937 = vpack.c.b16 %v915, %v914
    %v938 = vpack.c.b16 %v917, %v916
    %v939 = vpack.c.b16 %v919, %v918
    %v940 = vpack.c.b16 %v921, %v920
    %v941 = vpack.c.b16 %v923, %v922
    %v942 = vpack.c.b16 %v925, %v924
    %v943 = vpack.c.b16 %v927, %v926
    %v944 = vpack.c.b16 %v929, %v928
    %v945 = vpack.c.b16 %v931, %v930
    %v946 = vpack.c.b16 %v933, %v932
    %v947 = vpack.c.b16 %v935, %v934
    %v956 = vunpack.c.l.b16 %v880
    %v957 = vunpack.c.l.b16 %v881
    %v958 = vunpack.c.l.b16 %v882
    %v959 = vunpack.c.l.b16 %v883
    %v960 = vunpack.c.l.b16 %v884
    %v961 = vunpack.c.l.b16 %v885
    %v962 = vunpack.c.l.b16 %v886
    %v963 = vunpack.c.l.b16 %v887
    %v964 = vpack.c.b16 %v957, %v956
    %v965 = vpack.c.b16 %v959, %v958
    %v966 = vpack.c.b16 %v961, %v960
    %v967 = vpack.c.b16 %v963, %v962
    %v973 = vsel %vm260, %v936, 0
    %v976 = vsel %vm260, %v937, 0
    %v979 = vsel %vm260, %v938, 0
    %v982 = vsel %vm260, %v939, 0
    %v985 = vsel %vm260, %v940, 0
    %v988 = vsel %vm260, %v941, 0
    %v991 = vsel %vm260, %v942, 0
    %v994 = vsel %vm260, %v943, 0
    %v997 = vsel %vm260, %v944, 0
    %v1000 = vsel %vm260, %v945, 0
    %v1003 = vsel %vm260, %v946, 0
    %v1006 = vsel %vm260, %v947, 0
    %1008 = vmatprep.subr.bf16.mxu0 0
    %1009 = vmatpush1.bf16.msra.mxu0 0
    %1010 = vmatprep.subr.bf16.mxu0 0
    %1011 = vmatpush1.bf16.msra.mxu0 0
    %1012 = vmatprep.subr.bf16.mxu0 0
    %1013 = vmatpush1.bf16.msra.mxu0 0
    %1014 = vmatprep.subr.bf16.mxu0 0
    %1015 = vmatpush1.bf16.msra.mxu0 0
    %1016 = vmatprep.subr.bf16.mxu0 0
    %1017 = vmatpush1.bf16.msra.mxu0 %v967
    %1018 = vmatprep.subr.bf16.mxu0 0
    %1019 = vmatpush1.bf16.msra.mxu0 %v966
    %1020 = vmatprep.subr.bf16.mxu0 0
    %1021 = vmatpush1.bf16.msra.mxu0 %v965
    %1022 = vmatprep.subr.bf16.mxu0 0
    %1023 = vmatpush1.bf16.msra.mxu0 %v964
    %1024 = vmatprep.subr.bf16.mxu0 0
    %1025 = vmatpush2.bf16.msra.mxu0 0
    %1026 = vmatprep.subr.bf16.mxu0 0
    %1027 = vmatpush2.bf16.msra.mxu0 0
    %1028 = vmatprep.subr.bf16.mxu0 0
    %1029 = vmatpush2.bf16.msra.mxu0 0
    %1030 = vmatprep.subr.bf16.mxu0 0
    %1031 = vmatpush2.bf16.msra.mxu0 0
    %1032 = vmatprep.subr.bf16.mxu0 0
    %1033 = vmatpush2.bf16.msra.mxu0 0
    %1034 = vmatprep.subr.bf16.mxu0 0
    %1035 = vmatpush2.bf16.msra.mxu0 0
    %1036 = vmatprep.subr.bf16.mxu0 0
    %1037 = vmatpush2.bf16.msra.mxu0 0
    %1038 = vmatprep.subr.bf16.mxu0 0
    %1039 = vmatpush2.bf16.msra.mxu0 0
    %1040 = vmatprep.mubr.bf16.mxu0 0
    %1041 = vmatmul.mubr.bf16.gmra.mxu0 %v973
    %v1042 = vpop.f32.mrf.mxu0
    %v1043 = vadd.f32 0.0, %v1042
    %v1044 = vpop.f32.mrf.mxu0
    %v1045 = vpop.f32.mrf.mxu0
    %v1046 = vadd.f32 0.0, %v1045
    %v1047 = vpop.f32.mrf.mxu0
    %1048 = vmatprep.mubr.bf16.mxu0 0
    %1049 = vmatmul.mubr.bf16.gmra.mxu0 %v976
    %v1050 = vpop.f32.mrf.mxu0
    %v1051 = vadd.f32 0.0, %v1050
    %v1052 = vpop.f32.mrf.mxu0
    %v1053 = vpop.f32.mrf.mxu0
    %v1054 = vadd.f32 0.0, %v1053
    %v1055 = vpop.f32.mrf.mxu0
    %1056 = vmatprep.mubr.bf16.mxu0 0
    %1057 = vmatmul.mubr.bf16.gmra.mxu0 %v979
    %v1058 = vpop.f32.mrf.mxu0
    %v1059 = vadd.f32 0.0, %v1058
    %v1060 = vpop.f32.mrf.mxu0
    %v1061 = vpop.f32.mrf.mxu0
    %v1062 = vadd.f32 0.0, %v1061
    %v1063 = vpop.f32.mrf.mxu0
    %1064 = vmatprep.mubr.bf16.mxu0 0
    %1065 = vmatmul.mubr.bf16.gmra.mxu0 %v982
    %v1066 = vpop.f32.mrf.mxu0
    %v1067 = vadd.f32 0.0, %v1066
    %v1068 = vpop.f32.mrf.mxu0
    %v1069 = vpop.f32.mrf.mxu0
    %v1070 = vadd.f32 0.0, %v1069
    %v1071 = vpop.f32.mrf.mxu0
    %1072 = vmatprep.mubr.bf16.mxu0 0
    %1073 = vmatmul.mubr.bf16.gmra.mxu0 %v985
    %v1074 = vpop.f32.mrf.mxu0
    %v1075 = vadd.f32 0.0, %v1074
    %v1076 = vpop.f32.mrf.mxu0
    %v1077 = vpop.f32.mrf.mxu0
    %v1078 = vadd.f32 0.0, %v1077
    %v1079 = vpop.f32.mrf.mxu0
    %1080 = vmatprep.mubr.bf16.mxu0 0
    %1081 = vmatmul.mubr.bf16.gmra.mxu0 %v988
    %v1082 = vpop.f32.mrf.mxu0
    %v1083 = vadd.f32 0.0, %v1082
    %v1084 = vpop.f32.mrf.mxu0
    %v1085 = vpop.f32.mrf.mxu0
    %v1086 = vadd.f32 0.0, %v1085
    %v1087 = vpop.f32.mrf.mxu0
    %1088 = vmatprep.mubr.bf16.mxu0 0
    %1089 = vmatmul.mubr.bf16.gmra.mxu0 %v991
    %v1090 = vpop.f32.mrf.mxu0
    %v1091 = vadd.f32 0.0, %v1090
    %v1092 = vpop.f32.mrf.mxu0
    %v1093 = vpop.f32.mrf.mxu0
    %v1094 = vadd.f32 0.0, %v1093
    %v1095 = vpop.f32.mrf.mxu0
    %1096 = vmatprep.mubr.bf16.mxu0 0
    %1097 = vmatmul.mubr.bf16.gmra.mxu0 %v994
    %v1098 = vpop.f32.mrf.mxu0
    %v1099 = vadd.f32 0.0, %v1098
    %v1100 = vpop.f32.mrf.mxu0
    %v1101 = vpop.f32.mrf.mxu0
    %v1102 = vadd.f32 0.0, %v1101
    %v1103 = vpop.f32.mrf.mxu0
    %1104 = vmatprep.mubr.bf16.mxu0 0
    %1105 = vmatmul.mubr.bf16.gmra.mxu0 %v997
    %v1106 = vpop.f32.mrf.mxu0
    %v1107 = vadd.f32 0.0, %v1106
    %v1108 = vpop.f32.mrf.mxu0
    %v1109 = vpop.f32.mrf.mxu0
    %v1110 = vadd.f32 0.0, %v1109
    %v1111 = vpop.f32.mrf.mxu0
    %1112 = vmatprep.mubr.bf16.mxu0 0
    %1113 = vmatmul.mubr.bf16.gmra.mxu0 %v1000
    %v1114 = vpop.f32.mrf.mxu0
    %v1115 = vadd.f32 0.0, %v1114
    %v1116 = vpop.f32.mrf.mxu0
    %v1117 = vpop.f32.mrf.mxu0
    %v1118 = vadd.f32 0.0, %v1117
    %v1119 = vpop.f32.mrf.mxu0
    %1120 = vmatprep.mubr.bf16.mxu0 0
    %1121 = vmatmul.mubr.bf16.gmra.mxu0 %v1003
    %v1122 = vpop.f32.mrf.mxu0
    %v1123 = vadd.f32 0.0, %v1122
    %v1124 = vpop.f32.mrf.mxu0
    %v1125 = vpop.f32.mrf.mxu0
    %v1126 = vadd.f32 0.0, %v1125
    %v1127 = vpop.f32.mrf.mxu0
    %1128 = vmatprep.mubr.bf16.mxu0 0
    %1129 = vmatmul.mubr.bf16.gmra.mxu0 %v1006
    %v1130 = vpop.f32.mrf.mxu0
    %v1131 = vadd.f32 0.0, %v1130
    %v1132 = vpop.f32.mrf.mxu0
    %v1133 = vpop.f32.mrf.mxu0
    %v1134 = vadd.f32 0.0, %v1133
    %v1135 = vpop.f32.mrf.mxu0
    %1136 = vdwg.mxu0
    %v1137 = vadd.f32 %v831, %v1043
    %v1138 = vadd.f32 %v832, %v1046
    %v1139 = vadd.f32 %v833, %v1051
    %v1140 = vadd.f32 %v834, %v1054
    %v1141 = vadd.f32 %v835, %v1059
    %v1142 = vadd.f32 %v836, %v1062
    %v1143 = vadd.f32 %v837, %v1067
    %v1144 = vadd.f32 %v838, %v1070
    %v1145 = vadd.f32 %v839, %v1075
    %v1146 = vadd.f32 %v840, %v1078
    %v1147 = vadd.f32 %v841, %v1083
    %v1148 = vadd.f32 %v842, %v1086
    %v1149 = vadd.f32 %v843, %v1091
    %v1150 = vadd.f32 %v844, %v1094
    %v1151 = vadd.f32 %v845, %v1099
    %v1152 = vadd.f32 %v846, %v1102
    %v1153 = vadd.f32 %v847, %v1107
    %v1154 = vadd.f32 %v848, %v1110
    %v1155 = vadd.f32 %v849, %v1115
    %v1156 = vadd.f32 %v850, %v1118
    %v1157 = vadd.f32 %v851, %v1123
    %v1158 = vadd.f32 %v852, %v1126
    %v1159 = vadd.f32 %v853, %v1131
    %v1160 = vadd.f32 %v854, %v1134
    %v1161 = vld [vmem:[%s0 + $0x8] sm:$0xf]
    %v1162 = vld [vmem:[%s0 + $0xc] sm:$0xf]
    %v1163 = vld [vmem:[%s0 + $0x10] sm:$0xf]
    %v1164 = vld [vmem:[%s0 + $0x14] sm:$0xf]
    %v1165 = vld [vmem:[%s0 + $0x18] sm:$0xf]
    %v1166 = vld [vmem:[%s0 + $0x1c] sm:$0xf]
    %v1167 = vld [vmem:[%s0 + $0x20] sm:$0xf]
    %v1168 = vld [vmem:[%s0 + $0x24] sm:$0xf]
    %v1169 = vld [vmem:[%s0 + $0x28] sm:$0xf]
    %v1170 = vld [vmem:[%s0 + $0x2c] sm:$0xf]
    %v1171 = vld [vmem:[%s0 + $0x30] sm:$0xf]
    %v1172 = vld [vmem:[%s0 + $0x34] sm:$0xf]
    %v1173 = vld [vmem:[%s0 + $0x38] sm:$0xf]
    %v1174 = vld [vmem:[%s0 + $0x3c] sm:$0xf]
    %v1175 = vld [vmem:[%s0 + $0x40] sm:$0xf]
    %v1176 = vld [vmem:[%s0 + $0x44] sm:$0xf]
    %v1177 = vld [vmem:[%s0 + $0x48] sm:$0xf]
    %v1178 = vld [vmem:[%s0 + $0x4c] sm:$0xf]
    %v1179 = vld [vmem:[%s0 + $0x50] sm:$0xf]
    %v1180 = vld [vmem:[%s0 + $0x54] sm:$0xf]
    %v1181 = vld [vmem:[%s0 + $0x58] sm:$0xf]
    %v1182 = vld [vmem:[%s0 + $0x5c] sm:$0xf]
    %v1183 = vld [vmem:[%s0 + $0x60] sm:$0xf]
    %v1184 = vld [vmem:[%s0 + $0x64] sm:$0xf]
    %v1185 = vld [vmem:[%s0 + $0x68] sm:$0x1]
    %s1186 = scalar_lea.vmem [#allocation2], 128
    %v1187 = vld [vmem:[%s1186] sm:$0xf]
    %v1188 = vld [vmem:[%s1186 + $0x4] sm:$0xf]
    %v1189 = vld [vmem:[%s1186 + $0x8] sm:$0xf]
    %v1190 = vld [vmem:[%s1186 + $0xc] sm:$0xf]
    %v1191 = vld [vmem:[%s1186 + $0x10] sm:$0xf]
    %v1192 = vld [vmem:[%s1186 + $0x14] sm:$0xf]
    %v1193 = vld [vmem:[%s1186 + $0x18] sm:$0xf]
    %v1194 = vld [vmem:[%s1186 + $0x1c] sm:$0xf]
    %v1220 = vunpack.c.l.b16 %v1161
    %v1221 = vunpack.c.l.b16 %v1162
    %v1222 = vunpack.c.l.b16 %v1163
    %v1223 = vunpack.c.l.b16 %v1164
    %v1224 = vunpack.c.l.b16 %v1165
    %v1225 = vunpack.c.l.b16 %v1166
    %v1226 = vunpack.c.l.b16 %v1167
    %v1227 = vunpack.c.l.b16 %v1168
    %v1228 = vunpack.c.l.b16 %v1169
    %v1229 = vunpack.c.l.b16 %v1170
    %v1230 = vunpack.c.l.b16 %v1171
    %v1231 = vunpack.c.l.b16 %v1172
    %v1232 = vunpack.c.l.b16 %v1173
    %v1233 = vunpack.c.l.b16 %v1174
    %v1234 = vunpack.c.l.b16 %v1175
    %v1235 = vunpack.c.l.b16 %v1176
    %v1236 = vunpack.c.l.b16 %v1177
    %v1237 = vunpack.c.l.b16 %v1178
    %v1238 = vunpack.c.l.b16 %v1179
    %v1239 = vunpack.c.l.b16 %v1180
    %v1240 = vunpack.c.l.b16 %v1181
    %v1241 = vunpack.c.l.b16 %v1182
    %v1242 = vunpack.c.l.b16 %v1183
    %v1243 = vunpack.c.l.b16 %v1184
    %v1244 = vunpack.c.l.b16 %v1185
    %v1245 = vpack.c.b16 %v1221, %v1220
    %v1246 = vpack.c.b16 %v1223, %v1222
    %v1247 = vpack.c.b16 %v1225, %v1224
    %v1248 = vpack.c.b16 %v1227, %v1226
    %v1249 = vpack.c.b16 %v1229, %v1228
    %v1250 = vpack.c.b16 %v1231, %v1230
    %v1251 = vpack.c.b16 %v1233, %v1232
    %v1252 = vpack.c.b16 %v1235, %v1234
    %v1253 = vpack.c.b16 %v1237, %v1236
    %v1254 = vpack.c.b16 %v1239, %v1238
    %v1255 = vpack.c.b16 %v1241, %v1240
    %v1256 = vpack.c.b16 %v1243, %v1242
    %v1257 = vpack.c.b16 %v1244, %v1244
    %v1259 = vshrl.u32 %v1245, 16
    %v1261 = vshll.u32 %v1245, 16
    %v1263 = vrot.slane %v1261, 1
    %v1264 = vor.u32 %v1259, %v1263
    %v1266 = vshll.u32 %v1246, 16
    %v1268 = vrot.slane %v1266, 1
    %v1269 = vsel %vm135, %v1264, %v1268
    %v1270 = vshrl.u32 %v1246, 16
    %v1272 = vor.u32 %v1270, %v1268
    %v1274 = vshll.u32 %v1247, 16
    %v1276 = vrot.slane %v1274, 1
    %v1277 = vsel %vm135, %v1272, %v1276
    %v1278 = vshrl.u32 %v1247, 16
    %v1280 = vor.u32 %v1278, %v1276
    %v1282 = vshll.u32 %v1248, 16
    %v1284 = vrot.slane %v1282, 1
    %v1285 = vsel %vm135, %v1280, %v1284
    %v1286 = vshrl.u32 %v1248, 16
    %v1288 = vor.u32 %v1286, %v1284
    %v1290 = vshll.u32 %v1249, 16
    %v1292 = vrot.slane %v1290, 1
    %v1293 = vsel %vm135, %v1288, %v1292
    %v1294 = vshrl.u32 %v1249, 16
    %v1296 = vor.u32 %v1294, %v1292
    %v1298 = vshll.u32 %v1250, 16
    %v1300 = vrot.slane %v1298, 1
    %v1301 = vsel %vm135, %v1296, %v1300
    %v1302 = vshrl.u32 %v1250, 16
    %v1304 = vor.u32 %v1302, %v1300
    %v1306 = vshll.u32 %v1251, 16
    %v1308 = vrot.slane %v1306, 1
    %v1309 = vsel %vm135, %v1304, %v1308
    %v1310 = vshrl.u32 %v1251, 16
    %v1312 = vor.u32 %v1310, %v1308
    %v1314 = vshll.u32 %v1252, 16
    %v1316 = vrot.slane %v1314, 1
    %v1317 = vsel %vm135, %v1312, %v1316
    %v1318 = vshrl.u32 %v1252, 16
    %v1320 = vor.u32 %v1318, %v1316
    %v1322 = vshll.u32 %v1253, 16
    %v1324 = vrot.slane %v1322, 1
    %v1325 = vsel %vm135, %v1320, %v1324
    %v1326 = vshrl.u32 %v1253, 16
    %v1328 = vor.u32 %v1326, %v1324
    %v1330 = vshll.u32 %v1254, 16
    %v1332 = vrot.slane %v1330, 1
    %v1333 = vsel %vm135, %v1328, %v1332
    %v1334 = vshrl.u32 %v1254, 16
    %v1336 = vor.u32 %v1334, %v1332
    %v1338 = vshll.u32 %v1255, 16
    %v1340 = vrot.slane %v1338, 1
    %v1341 = vsel %vm135, %v1336, %v1340
    %v1342 = vshrl.u32 %v1255, 16
    %v1344 = vor.u32 %v1342, %v1340
    %v1346 = vshll.u32 %v1256, 16
    %v1348 = vrot.slane %v1346, 1
    %v1349 = vsel %vm135, %v1344, %v1348
    %v1350 = vshrl.u32 %v1256, 16
    %v1352 = vor.u32 %v1350, %v1348
    %v1354 = vshll.u32 %v1257, 16
    %v1356 = vrot.slane %v1354, 1
    %v1357 = vsel %vm135, %v1352, %v1356
    %v1366 = vunpack.c.l.b16 %v1187
    %v1367 = vunpack.c.l.b16 %v1188
    %v1368 = vunpack.c.l.b16 %v1189
    %v1369 = vunpack.c.l.b16 %v1190
    %v1370 = vunpack.c.l.b16 %v1191
    %v1371 = vunpack.c.l.b16 %v1192
    %v1372 = vunpack.c.l.b16 %v1193
    %v1373 = vunpack.c.l.b16 %v1194
    %v1374 = vpack.c.b16 %v1367, %v1366
    %v1375 = vpack.c.b16 %v1369, %v1368
    %v1376 = vpack.c.b16 %v1371, %v1370
    %v1377 = vpack.c.b16 %v1373, %v1372
    %v1383 = vsel %vm260, %v1269, 0
    %v1386 = vsel %vm260, %v1277, 0
    %v1389 = vsel %vm260, %v1285, 0
    %v1392 = vsel %vm260, %v1293, 0
    %v1395 = vsel %vm260, %v1301, 0
    %v1398 = vsel %vm260, %v1309, 0
    %v1401 = vsel %vm260, %v1317, 0
    %v1404 = vsel %vm260, %v1325, 0
    %v1407 = vsel %vm260, %v1333, 0
    %v1410 = vsel %vm260, %v1341, 0
    %v1413 = vsel %vm260, %v1349, 0
    %v1416 = vsel %vm260, %v1357, 0
    %1418 = vmatprep.subr.bf16.mxu0 0
    %1419 = vmatpush1.bf16.msra.mxu0 0
    %1420 = vmatprep.subr.bf16.mxu0 0
    %1421 = vmatpush1.bf16.msra.mxu0 0
    %1422 = vmatprep.subr.bf16.mxu0 0
    %1423 = vmatpush1.bf16.msra.mxu0 0
    %1424 = vmatprep.subr.bf16.mxu0 0
    %1425 = vmatpush1.bf16.msra.mxu0 0
    %1426 = vmatprep.subr.bf16.mxu0 0
    %1427 = vmatpush1.bf16.msra.mxu0 %v1377
    %1428 = vmatprep.subr.bf16.mxu0 0
    %1429 = vmatpush1.bf16.msra.mxu0 %v1376
    %1430 = vmatprep.subr.bf16.mxu0 0
    %1431 = vmatpush1.bf16.msra.mxu0 %v1375
    %1432 = vmatprep.subr.bf16.mxu0 0
    %1433 = vmatpush1.bf16.msra.mxu0 %v1374
    %1434 = vmatprep.subr.bf16.mxu0 0
    %1435 = vmatpush2.bf16.msra.mxu0 0
    %1436 = vmatprep.subr.bf16.mxu0 0
    %1437 = vmatpush2.bf16.msra.mxu0 0
    %1438 = vmatprep.subr.bf16.mxu0 0
    %1439 = vmatpush2.bf16.msra.mxu0 0
    %1440 = vmatprep.subr.bf16.mxu0 0
    %1441 = vmatpush2.bf16.msra.mxu0 0
    %1442 = vmatprep.subr.bf16.mxu0 0
    %1443 = vmatpush2.bf16.msra.mxu0 0
    %1444 = vmatprep.subr.bf16.mxu0 0
    %1445 = vmatpush2.bf16.msra.mxu0 0
    %1446 = vmatprep.subr.bf16.mxu0 0
    %1447 = vmatpush2.bf16.msra.mxu0 0
    %1448 = vmatprep.subr.bf16.mxu0 0
    %1449 = vmatpush2.bf16.msra.mxu0 0
    %1450 = vmatprep.mubr.bf16.mxu0 0
    %1451 = vmatmul.mubr.bf16.gmra.mxu0 %v1383
    %v1452 = vpop.f32.mrf.mxu0
    %v1453 = vadd.f32 0.0, %v1452
    %v1454 = vpop.f32.mrf.mxu0
    %v1455 = vpop.f32.mrf.mxu0
    %v1456 = vadd.f32 0.0, %v1455
    %v1457 = vpop.f32.mrf.mxu0
    %1458 = vmatprep.mubr.bf16.mxu0 0
    %1459 = vmatmul.mubr.bf16.gmra.mxu0 %v1386
    %v1460 = vpop.f32.mrf.mxu0
    %v1461 = vadd.f32 0.0, %v1460
    %v1462 = vpop.f32.mrf.mxu0
    %v1463 = vpop.f32.mrf.mxu0
    %v1464 = vadd.f32 0.0, %v1463
    %v1465 = vpop.f32.mrf.mxu0
    %1466 = vmatprep.mubr.bf16.mxu0 0
    %1467 = vmatmul.mubr.bf16.gmra.mxu0 %v1389
    %v1468 = vpop.f32.mrf.mxu0
    %v1469 = vadd.f32 0.0, %v1468
    %v1470 = vpop.f32.mrf.mxu0
    %v1471 = vpop.f32.mrf.mxu0
    %v1472 = vadd.f32 0.0, %v1471
    %v1473 = vpop.f32.mrf.mxu0
    %1474 = vmatprep.mubr.bf16.mxu0 0
    %1475 = vmatmul.mubr.bf16.gmra.mxu0 %v1392
    %v1476 = vpop.f32.mrf.mxu0
    %v1477 = vadd.f32 0.0, %v1476
    %v1478 = vpop.f32.mrf.mxu0
    %v1479 = vpop.f32.mrf.mxu0
    %v1480 = vadd.f32 0.0, %v1479
    %v1481 = vpop.f32.mrf.mxu0
    %1482 = vmatprep.mubr.bf16.mxu0 0
    %1483 = vmatmul.mubr.bf16.gmra.mxu0 %v1395
    %v1484 = vpop.f32.mrf.mxu0
    %v1485 = vadd.f32 0.0, %v1484
    %v1486 = vpop.f32.mrf.mxu0
    %v1487 = vpop.f32.mrf.mxu0
    %v1488 = vadd.f32 0.0, %v1487
    %v1489 = vpop.f32.mrf.mxu0
    %1490 = vmatprep.mubr.bf16.mxu0 0
    %1491 = vmatmul.mubr.bf16.gmra.mxu0 %v1398
    %v1492 = vpop.f32.mrf.mxu0
    %v1493 = vadd.f32 0.0, %v1492
    %v1494 = vpop.f32.mrf.mxu0
    %v1495 = vpop.f32.mrf.mxu0
    %v1496 = vadd.f32 0.0, %v1495
    %v1497 = vpop.f32.mrf.mxu0
    %1498 = vmatprep.mubr.bf16.mxu0 0
    %1499 = vmatmul.mubr.bf16.gmra.mxu0 %v1401
    %v1500 = vpop.f32.mrf.mxu0
    %v1501 = vadd.f32 0.0, %v1500
    %v1502 = vpop.f32.mrf.mxu0
    %v1503 = vpop.f32.mrf.mxu0
    %v1504 = vadd.f32 0.0, %v1503
    %v1505 = vpop.f32.mrf.mxu0
    %1506 = vmatprep.mubr.bf16.mxu0 0
    %1507 = vmatmul.mubr.bf16.gmra.mxu0 %v1404
    %v1508 = vpop.f32.mrf.mxu0
    %v1509 = vadd.f32 0.0, %v1508
    %v1510 = vpop.f32.mrf.mxu0
    %v1511 = vpop.f32.mrf.mxu0
    %v1512 = vadd.f32 0.0, %v1511
    %v1513 = vpop.f32.mrf.mxu0
    %1514 = vmatprep.mubr.bf16.mxu0 0
    %1515 = vmatmul.mubr.bf16.gmra.mxu0 %v1407
    %v1516 = vpop.f32.mrf.mxu0
    %v1517 = vadd.f32 0.0, %v1516
    %v1518 = vpop.f32.mrf.mxu0
    %v1519 = vpop.f32.mrf.mxu0
    %v1520 = vadd.f32 0.0, %v1519
    %v1521 = vpop.f32.mrf.mxu0
    %1522 = vmatprep.mubr.bf16.mxu0 0
    %1523 = vmatmul.mubr.bf16.gmra.mxu0 %v1410
    %v1524 = vpop.f32.mrf.mxu0
    %v1525 = vadd.f32 0.0, %v1524
    %v1526 = vpop.f32.mrf.mxu0
    %v1527 = vpop.f32.mrf.mxu0
    %v1528 = vadd.f32 0.0, %v1527
    %v1529 = vpop.f32.mrf.mxu0
    %1530 = vmatprep.mubr.bf16.mxu0 0
    %1531 = vmatmul.mubr.bf16.gmra.mxu0 %v1413
    %v1532 = vpop.f32.mrf.mxu0
    %v1533 = vadd.f32 0.0, %v1532
    %v1534 = vpop.f32.mrf.mxu0
    %v1535 = vpop.f32.mrf.mxu0
    %v1536 = vadd.f32 0.0, %v1535
    %v1537 = vpop.f32.mrf.mxu0
    %1538 = vmatprep.mubr.bf16.mxu0 0
    %1539 = vmatmul.mubr.bf16.gmra.mxu0 %v1416
    %v1540 = vpop.f32.mrf.mxu0
    %v1541 = vadd.f32 0.0, %v1540
    %v1542 = vpop.f32.mrf.mxu0
    %v1543 = vpop.f32.mrf.mxu0
    %v1544 = vadd.f32 0.0, %v1543
    %v1545 = vpop.f32.mrf.mxu0
    %1546 = vdwg.mxu0
    %v1547 = vadd.f32 %v1137, %v1453
    %v1548 = vadd.f32 %v1138, %v1456
    %v1549 = vadd.f32 %v1139, %v1461
    %v1550 = vadd.f32 %v1140, %v1464
    %v1551 = vadd.f32 %v1141, %v1469
    %v1552 = vadd.f32 %v1142, %v1472
    %v1553 = vadd.f32 %v1143, %v1477
    %v1554 = vadd.f32 %v1144, %v1480
    %v1555 = vadd.f32 %v1145, %v1485
    %v1556 = vadd.f32 %v1146, %v1488
    %v1557 = vadd.f32 %v1147, %v1493
    %v1558 = vadd.f32 %v1148, %v1496
    %v1559 = vadd.f32 %v1149, %v1501
    %v1560 = vadd.f32 %v1150, %v1504
    %v1561 = vadd.f32 %v1151, %v1509
    %v1562 = vadd.f32 %v1152, %v1512
    %v1563 = vadd.f32 %v1153, %v1517
    %v1564 = vadd.f32 %v1154, %v1520
    %v1565 = vadd.f32 %v1155, %v1525
    %v1566 = vadd.f32 %v1156, %v1528
    %v1567 = vadd.f32 %v1157, %v1533
    %v1568 = vadd.f32 %v1158, %v1536
    %v1569 = vadd.f32 %v1159, %v1541
    %v1570 = vadd.f32 %v1160, %v1544
    %v1571 = vld [vmem:[%s0 + $0x8] sm:$0xe]
    %s1572 = scalar_lea.vmem [#allocation2], 160
    %v1573 = vld [vmem:[%s1572] sm:$0xf]
    %v1574 = vld [vmem:[%s1572 + $0x4] sm:$0xf]
    %v1575 = vld [vmem:[%s1572 + $0x8] sm:$0xf]
    %v1576 = vld [vmem:[%s1572 + $0xc] sm:$0xf]
    %v1577 = vld [vmem:[%s1572 + $0x10] sm:$0xf]
    %v1578 = vld [vmem:[%s1572 + $0x14] sm:$0xf]
    %v1579 = vld [vmem:[%s1572 + $0x18] sm:$0xf]
    %v1580 = vld [vmem:[%s1572 + $0x1c] sm:$0xf]
    %v1582 = vunpack.c.l.b16 %v1571
    %v1583 = vpack.c.b16 %v1221, %v1582
    %v1584 = vrot.slane %v1583, 1
    %v1585 = vrot.slane %v1246, 1
    %v1586 = vsel %vm616, %v1584, %v1585
    %v1587 = vrot.slane %v1247, 1
    %v1588 = vsel %vm616, %v1585, %v1587
    %v1589 = vrot.slane %v1248, 1
    %v1590 = vsel %vm616, %v1587, %v1589
    %v1591 = vrot.slane %v1249, 1
    %v1592 = vsel %vm616, %v1589, %v1591
    %v1593 = vrot.slane %v1250, 1
    %v1594 = vsel %vm616, %v1591, %v1593
    %v1595 = vrot.slane %v1251, 1
    %v1596 = vsel %vm616, %v1593, %v1595
    %v1597 = vrot.slane %v1252, 1
    %v1598 = vsel %vm616, %v1595, %v1597
    %v1599 = vrot.slane %v1253, 1
    %v1600 = vsel %vm616, %v1597, %v1599
    %v1601 = vrot.slane %v1254, 1
    %v1602 = vsel %vm616, %v1599, %v1601
    %v1603 = vrot.slane %v1255, 1
    %v1604 = vsel %vm616, %v1601, %v1603
    %v1605 = vrot.slane %v1256, 1
    %v1606 = vsel %vm616, %v1603, %v1605
    %v1607 = vrot.slane %v1257, 1
    %v1608 = vsel %vm616, %v1605, %v1607
    %v1617 = vunpack.c.l.b16 %v1573
    %v1618 = vunpack.c.l.b16 %v1574
    %v1619 = vunpack.c.l.b16 %v1575
    %v1620 = vunpack.c.l.b16 %v1576
    %v1621 = vunpack.c.l.b16 %v1577
    %v1622 = vunpack.c.l.b16 %v1578
    %v1623 = vunpack.c.l.b16 %v1579
    %v1624 = vunpack.c.l.b16 %v1580
    %v1625 = vpack.c.b16 %v1618, %v1617
    %v1626 = vpack.c.b16 %v1620, %v1619
    %v1627 = vpack.c.b16 %v1622, %v1621
    %v1628 = vpack.c.b16 %v1624, %v1623
    %v1634 = vsel %vm260, %v1586, 0
    %v1637 = vsel %vm260, %v1588, 0
    %v1640 = vsel %vm260, %v1590, 0
    %v1643 = vsel %vm260, %v1592, 0
    %v1646 = vsel %vm260, %v1594, 0
    %v1649 = vsel %vm260, %v1596, 0
    %v1652 = vsel %vm260, %v1598, 0
    %v1655 = vsel %vm260, %v1600, 0
    %v1658 = vsel %vm260, %v1602, 0
    %v1661 = vsel %vm260, %v1604, 0
    %v1664 = vsel %vm260, %v1606, 0
    %v1667 = vsel %vm260, %v1608, 0
    %1669 = vmatprep.subr.bf16.mxu0 0
    %1670 = vmatpush1.bf16.msra.mxu0 0
    %1671 = vmatprep.subr.bf16.mxu0 0
    %1672 = vmatpush1.bf16.msra.mxu0 0
    %1673 = vmatprep.subr.bf16.mxu0 0
    %1674 = vmatpush1.bf16.msra.mxu0 0
    %1675 = vmatprep.subr.bf16.mxu0 0
    %1676 = vmatpush1.bf16.msra.mxu0 0
    %1677 = vmatprep.subr.bf16.mxu0 0
    %1678 = vmatpush1.bf16.msra.mxu0 %v1628
    %1679 = vmatprep.subr.bf16.mxu0 0
    %1680 = vmatpush1.bf16.msra.mxu0 %v1627
    %1681 = vmatprep.subr.bf16.mxu0 0
    %1682 = vmatpush1.bf16.msra.mxu0 %v1626
    %1683 = vmatprep.subr.bf16.mxu0 0
    %1684 = vmatpush1.bf16.msra.mxu0 %v1625
    %1685 = vmatprep.subr.bf16.mxu0 0
    %1686 = vmatpush2.bf16.msra.mxu0 0
    %1687 = vmatprep.subr.bf16.mxu0 0
    %1688 = vmatpush2.bf16.msra.mxu0 0
    %1689 = vmatprep.subr.bf16.mxu0 0
    %1690 = vmatpush2.bf16.msra.mxu0 0
    %1691 = vmatprep.subr.bf16.mxu0 0
    %1692 = vmatpush2.bf16.msra.mxu0 0
    %1693 = vmatprep.subr.bf16.mxu0 0
    %1694 = vmatpush2.bf16.msra.mxu0 0
    %1695 = vmatprep.subr.bf16.mxu0 0
    %1696 = vmatpush2.bf16.msra.mxu0 0
    %1697 = vmatprep.subr.bf16.mxu0 0
    %1698 = vmatpush2.bf16.msra.mxu0 0
    %1699 = vmatprep.subr.bf16.mxu0 0
    %1700 = vmatpush2.bf16.msra.mxu0 0
    %1701 = vmatprep.mubr.bf16.mxu0 0
    %1702 = vmatmul.mubr.bf16.gmra.mxu0 %v1634
    %v1703 = vpop.f32.mrf.mxu0
    %v1704 = vadd.f32 0.0, %v1703
    %v1705 = vpop.f32.mrf.mxu0
    %v1706 = vpop.f32.mrf.mxu0
    %v1707 = vadd.f32 0.0, %v1706
    %v1708 = vpop.f32.mrf.mxu0
    %1709 = vmatprep.mubr.bf16.mxu0 0
    %1710 = vmatmul.mubr.bf16.gmra.mxu0 %v1637
    %v1711 = vpop.f32.mrf.mxu0
    %v1712 = vadd.f32 0.0, %v1711
    %v1713 = vpop.f32.mrf.mxu0
    %v1714 = vpop.f32.mrf.mxu0
    %v1715 = vadd.f32 0.0, %v1714
    %v1716 = vpop.f32.mrf.mxu0
    %1717 = vmatprep.mubr.bf16.mxu0 0
    %1718 = vmatmul.mubr.bf16.gmra.mxu0 %v1640
    %v1719 = vpop.f32.mrf.mxu0
    %v1720 = vadd.f32 0.0, %v1719
    %v1721 = vpop.f32.mrf.mxu0
    %v1722 = vpop.f32.mrf.mxu0
    %v1723 = vadd.f32 0.0, %v1722
    %v1724 = vpop.f32.mrf.mxu0
    %1725 = vmatprep.mubr.bf16.mxu0 0
    %1726 = vmatmul.mubr.bf16.gmra.mxu0 %v1643
    %v1727 = vpop.f32.mrf.mxu0
    %v1728 = vadd.f32 0.0, %v1727
    %v1729 = vpop.f32.mrf.mxu0
    %v1730 = vpop.f32.mrf.mxu0
    %v1731 = vadd.f32 0.0, %v1730
    %v1732 = vpop.f32.mrf.mxu0
    %1733 = vmatprep.mubr.bf16.mxu0 0
    %1734 = vmatmul.mubr.bf16.gmra.mxu0 %v1646
    %v1735 = vpop.f32.mrf.mxu0
    %v1736 = vadd.f32 0.0, %v1735
    %v1737 = vpop.f32.mrf.mxu0
    %v1738 = vpop.f32.mrf.mxu0
    %v1739 = vadd.f32 0.0, %v1738
    %v1740 = vpop.f32.mrf.mxu0
    %1741 = vmatprep.mubr.bf16.mxu0 0
    %1742 = vmatmul.mubr.bf16.gmra.mxu0 %v1649
    %v1743 = vpop.f32.mrf.mxu0
    %v1744 = vadd.f32 0.0, %v1743
    %v1745 = vpop.f32.mrf.mxu0
    %v1746 = vpop.f32.mrf.mxu0
    %v1747 = vadd.f32 0.0, %v1746
    %v1748 = vpop.f32.mrf.mxu0
    %1749 = vmatprep.mubr.bf16.mxu0 0
    %1750 = vmatmul.mubr.bf16.gmra.mxu0 %v1652
    %v1751 = vpop.f32.mrf.mxu0
    %v1752 = vadd.f32 0.0, %v1751
    %v1753 = vpop.f32.mrf.mxu0
    %v1754 = vpop.f32.mrf.mxu0
    %v1755 = vadd.f32 0.0, %v1754
    %v1756 = vpop.f32.mrf.mxu0
    %1757 = vmatprep.mubr.bf16.mxu0 0
    %1758 = vmatmul.mubr.bf16.gmra.mxu0 %v1655
    %v1759 = vpop.f32.mrf.mxu0
    %v1760 = vadd.f32 0.0, %v1759
    %v1761 = vpop.f32.mrf.mxu0
    %v1762 = vpop.f32.mrf.mxu0
    %v1763 = vadd.f32 0.0, %v1762
    %v1764 = vpop.f32.mrf.mxu0
    %1765 = vmatprep.mubr.bf16.mxu0 0
    %1766 = vmatmul.mubr.bf16.gmra.mxu0 %v1658
    %v1767 = vpop.f32.mrf.mxu0
    %v1768 = vadd.f32 0.0, %v1767
    %v1769 = vpop.f32.mrf.mxu0
    %v1770 = vpop.f32.mrf.mxu0
    %v1771 = vadd.f32 0.0, %v1770
    %v1772 = vpop.f32.mrf.mxu0
    %1773 = vmatprep.mubr.bf16.mxu0 0
    %1774 = vmatmul.mubr.bf16.gmra.mxu0 %v1661
    %v1775 = vpop.f32.mrf.mxu0
    %v1776 = vadd.f32 0.0, %v1775
    %v1777 = vpop.f32.mrf.mxu0
    %v1778 = vpop.f32.mrf.mxu0
    %v1779 = vadd.f32 0.0, %v1778
    %v1780 = vpop.f32.mrf.mxu0
    %1781 = vmatprep.mubr.bf16.mxu0 0
    %1782 = vmatmul.mubr.bf16.gmra.mxu0 %v1664
    %v1783 = vpop.f32.mrf.mxu0
    %v1784 = vadd.f32 0.0, %v1783
    %v1785 = vpop.f32.mrf.mxu0
    %v1786 = vpop.f32.mrf.mxu0
    %v1787 = vadd.f32 0.0, %v1786
    %v1788 = vpop.f32.mrf.mxu0
    %1789 = vmatprep.mubr.bf16.mxu0 0
    %1790 = vmatmul.mubr.bf16.gmra.mxu0 %v1667
    %v1791 = vpop.f32.mrf.mxu0
    %v1792 = vadd.f32 0.0, %v1791
    %v1793 = vpop.f32.mrf.mxu0
    %v1794 = vpop.f32.mrf.mxu0
    %v1795 = vadd.f32 0.0, %v1794
    %v1796 = vpop.f32.mrf.mxu0
    %1797 = vdwg.mxu0
    %v1798 = vadd.f32 %v1547, %v1704
    %v1799 = vadd.f32 %v1548, %v1707
    %v1800 = vadd.f32 %v1549, %v1712
    %v1801 = vadd.f32 %v1550, %v1715
    %v1802 = vadd.f32 %v1551, %v1720
    %v1803 = vadd.f32 %v1552, %v1723
    %v1804 = vadd.f32 %v1553, %v1728
    %v1805 = vadd.f32 %v1554, %v1731
    %v1806 = vadd.f32 %v1555, %v1736
    %v1807 = vadd.f32 %v1556, %v1739
    %v1808 = vadd.f32 %v1557, %v1744
    %v1809 = vadd.f32 %v1558, %v1747
    %v1810 = vadd.f32 %v1559, %v1752
    %v1811 = vadd.f32 %v1560, %v1755
    %v1812 = vadd.f32 %v1561, %v1760
    %v1813 = vadd.f32 %v1562, %v1763
    %v1814 = vadd.f32 %v1563, %v1768
    %v1815 = vadd.f32 %v1564, %v1771
    %v1816 = vadd.f32 %v1565, %v1776
    %v1817 = vadd.f32 %v1566, %v1779
    %v1818 = vadd.f32 %v1567, %v1784
    %v1819 = vadd.f32 %v1568, %v1787
    %v1820 = vadd.f32 %v1569, %v1792
    %v1821 = vadd.f32 %v1570, %v1795
    %v1822 = vld [vmem:[%s0 + $0x10] sm:$0xf]
    %v1823 = vld [vmem:[%s0 + $0x14] sm:$0xf]
    %v1824 = vld [vmem:[%s0 + $0x18] sm:$0xf]
    %v1825 = vld [vmem:[%s0 + $0x1c] sm:$0xf]
    %v1826 = vld [vmem:[%s0 + $0x20] sm:$0xf]
    %v1827 = vld [vmem:[%s0 + $0x24] sm:$0xf]
    %v1828 = vld [vmem:[%s0 + $0x28] sm:$0xf]
    %v1829 = vld [vmem:[%s0 + $0x2c] sm:$0xf]
    %v1830 = vld [vmem:[%s0 + $0x30] sm:$0xf]
    %v1831 = vld [vmem:[%s0 + $0x34] sm:$0xf]
    %v1832 = vld [vmem:[%s0 + $0x38] sm:$0xf]
    %v1833 = vld [vmem:[%s0 + $0x3c] sm:$0xf]
    %v1834 = vld [vmem:[%s0 + $0x40] sm:$0xf]
    %v1835 = vld [vmem:[%s0 + $0x44] sm:$0xf]
    %v1836 = vld [vmem:[%s0 + $0x48] sm:$0xf]
    %v1837 = vld [vmem:[%s0 + $0x4c] sm:$0xf]
    %v1838 = vld [vmem:[%s0 + $0x50] sm:$0xf]
    %v1839 = vld [vmem:[%s0 + $0x54] sm:$0xf]
    %v1840 = vld [vmem:[%s0 + $0x58] sm:$0xf]
    %v1841 = vld [vmem:[%s0 + $0x5c] sm:$0xf]
    %v1842 = vld [vmem:[%s0 + $0x60] sm:$0xf]
    %v1843 = vld [vmem:[%s0 + $0x64] sm:$0xf]
    %v1844 = vld [vmem:[%s0 + $0x68] sm:$0xf]
    %v1845 = vld [vmem:[%s0 + $0x6c] sm:$0xf]
    %s1846 = scalar_lea.vmem [#allocation2], 192
    %v1847 = vld [vmem:[%s1846] sm:$0xf]
    %v1848 = vld [vmem:[%s1846 + $0x4] sm:$0xf]
    %v1849 = vld [vmem:[%s1846 + $0x8] sm:$0xf]
    %v1850 = vld [vmem:[%s1846 + $0xc] sm:$0xf]
    %v1851 = vld [vmem:[%s1846 + $0x10] sm:$0xf]
    %v1852 = vld [vmem:[%s1846 + $0x14] sm:$0xf]
    %v1853 = vld [vmem:[%s1846 + $0x18] sm:$0xf]
    %v1854 = vld [vmem:[%s1846 + $0x1c] sm:$0xf]
    %v1879 = vunpack.c.l.b16 %v1822
    %v1880 = vunpack.c.l.b16 %v1823
    %v1881 = vunpack.c.l.b16 %v1824
    %v1882 = vunpack.c.l.b16 %v1825
    %v1883 = vunpack.c.l.b16 %v1826
    %v1884 = vunpack.c.l.b16 %v1827
    %v1885 = vunpack.c.l.b16 %v1828
    %v1886 = vunpack.c.l.b16 %v1829
    %v1887 = vunpack.c.l.b16 %v1830
    %v1888 = vunpack.c.l.b16 %v1831
    %v1889 = vunpack.c.l.b16 %v1832
    %v1890 = vunpack.c.l.b16 %v1833
    %v1891 = vunpack.c.l.b16 %v1834
    %v1892 = vunpack.c.l.b16 %v1835
    %v1893 = vunpack.c.l.b16 %v1836
    %v1894 = vunpack.c.l.b16 %v1837
    %v1895 = vunpack.c.l.b16 %v1838
    %v1896 = vunpack.c.l.b16 %v1839
    %v1897 = vunpack.c.l.b16 %v1840
    %v1898 = vunpack.c.l.b16 %v1841
    %v1899 = vunpack.c.l.b16 %v1842
    %v1900 = vunpack.c.l.b16 %v1843
    %v1901 = vunpack.c.l.b16 %v1844
    %v1902 = vunpack.c.l.b16 %v1845
    %v1903 = vpack.c.b16 %v1880, %v1879
    %v1904 = vpack.c.b16 %v1882, %v1881
    %v1905 = vpack.c.b16 %v1884, %v1883
    %v1906 = vpack.c.b16 %v1886, %v1885
    %v1907 = vpack.c.b16 %v1888, %v1887
    %v1908 = vpack.c.b16 %v1890, %v1889
    %v1909 = vpack.c.b16 %v1892, %v1891
    %v1910 = vpack.c.b16 %v1894, %v1893
    %v1911 = vpack.c.b16 %v1896, %v1895
    %v1912 = vpack.c.b16 %v1898, %v1897
    %v1913 = vpack.c.b16 %v1900, %v1899
    %v1914 = vpack.c.b16 %v1902, %v1901
    %v1923 = vunpack.c.l.b16 %v1847
    %v1924 = vunpack.c.l.b16 %v1848
    %v1925 = vunpack.c.l.b16 %v1849
    %v1926 = vunpack.c.l.b16 %v1850
    %v1927 = vunpack.c.l.b16 %v1851
    %v1928 = vunpack.c.l.b16 %v1852
    %v1929 = vunpack.c.l.b16 %v1853
    %v1930 = vunpack.c.l.b16 %v1854
    %v1931 = vpack.c.b16 %v1924, %v1923
    %v1932 = vpack.c.b16 %v1926, %v1925
    %v1933 = vpack.c.b16 %v1928, %v1927
    %v1934 = vpack.c.b16 %v1930, %v1929
    %v1940 = vsel %vm260, %v1903, 0
    %v1943 = vsel %vm260, %v1904, 0
    %v1946 = vsel %vm260, %v1905, 0
    %v1949 = vsel %vm260, %v1906, 0
    %v1952 = vsel %vm260, %v1907, 0
    %v1955 = vsel %vm260, %v1908, 0
    %v1958 = vsel %vm260, %v1909, 0
    %v1961 = vsel %vm260, %v1910, 0
    %v1964 = vsel %vm260, %v1911, 0
    %v1967 = vsel %vm260, %v1912, 0
    %v1970 = vsel %vm260, %v1913, 0
    %v1973 = vsel %vm260, %v1914, 0
    %1975 = vmatprep.subr.bf16.mxu0 0
    %1976 = vmatpush1.bf16.msra.mxu0 0
    %1977 = vmatprep.subr.bf16.mxu0 0
    %1978 = vmatpush1.bf16.msra.mxu0 0
    %1979 = vmatprep.subr.bf16.mxu0 0
    %1980 = vmatpush1.bf16.msra.mxu0 0
    %1981 = vmatprep.subr.bf16.mxu0 0
    %1982 = vmatpush1.bf16.msra.mxu0 0
    %1983 = vmatprep.subr.bf16.mxu0 0
    %1984 = vmatpush1.bf16.msra.mxu0 %v1934
    %1985 = vmatprep.subr.bf16.mxu0 0
    %1986 = vmatpush1.bf16.msra.mxu0 %v1933
    %1987 = vmatprep.subr.bf16.mxu0 0
    %1988 = vmatpush1.bf16.msra.mxu0 %v1932
    %1989 = vmatprep.subr.bf16.mxu0 0
    %1990 = vmatpush1.bf16.msra.mxu0 %v1931
    %1991 = vmatprep.subr.bf16.mxu0 0
    %1992 = vmatpush2.bf16.msra.mxu0 0
    %1993 = vmatprep.subr.bf16.mxu0 0
    %1994 = vmatpush2.bf16.msra.mxu0 0
    %1995 = vmatprep.subr.bf16.mxu0 0
    %1996 = vmatpush2.bf16.msra.mxu0 0
    %1997 = vmatprep.subr.bf16.mxu0 0
    %1998 = vmatpush2.bf16.msra.mxu0 0
    %1999 = vmatprep.subr.bf16.mxu0 0
    %2000 = vmatpush2.bf16.msra.mxu0 0
    %2001 = vmatprep.subr.bf16.mxu0 0
    %2002 = vmatpush2.bf16.msra.mxu0 0
    %2003 = vmatprep.subr.bf16.mxu0 0
    %2004 = vmatpush2.bf16.msra.mxu0 0
    %2005 = vmatprep.subr.bf16.mxu0 0
    %2006 = vmatpush2.bf16.msra.mxu0 0
    %2007 = vmatprep.mubr.bf16.mxu0 0
    %2008 = vmatmul.mubr.bf16.gmra.mxu0 %v1940
    %v2009 = vpop.f32.mrf.mxu0
    %v2010 = vadd.f32 0.0, %v2009
    %v2011 = vpop.f32.mrf.mxu0
    %v2012 = vpop.f32.mrf.mxu0
    %v2013 = vadd.f32 0.0, %v2012
    %v2014 = vpop.f32.mrf.mxu0
    %2015 = vmatprep.mubr.bf16.mxu0 0
    %2016 = vmatmul.mubr.bf16.gmra.mxu0 %v1943
    %v2017 = vpop.f32.mrf.mxu0
    %v2018 = vadd.f32 0.0, %v2017
    %v2019 = vpop.f32.mrf.mxu0
    %v2020 = vpop.f32.mrf.mxu0
    %v2021 = vadd.f32 0.0, %v2020
    %v2022 = vpop.f32.mrf.mxu0
    %2023 = vmatprep.mubr.bf16.mxu0 0
    %2024 = vmatmul.mubr.bf16.gmra.mxu0 %v1946
    %v2025 = vpop.f32.mrf.mxu0
    %v2026 = vadd.f32 0.0, %v2025
    %v2027 = vpop.f32.mrf.mxu0
    %v2028 = vpop.f32.mrf.mxu0
    %v2029 = vadd.f32 0.0, %v2028
    %v2030 = vpop.f32.mrf.mxu0
    %2031 = vmatprep.mubr.bf16.mxu0 0
    %2032 = vmatmul.mubr.bf16.gmra.mxu0 %v1949
    %v2033 = vpop.f32.mrf.mxu0
    %v2034 = vadd.f32 0.0, %v2033
    %v2035 = vpop.f32.mrf.mxu0
    %v2036 = vpop.f32.mrf.mxu0
    %v2037 = vadd.f32 0.0, %v2036
    %v2038 = vpop.f32.mrf.mxu0
    %2039 = vmatprep.mubr.bf16.mxu0 0
    %2040 = vmatmul.mubr.bf16.gmra.mxu0 %v1952
    %v2041 = vpop.f32.mrf.mxu0
    %v2042 = vadd.f32 0.0, %v2041
    %v2043 = vpop.f32.mrf.mxu0
    %v2044 = vpop.f32.mrf.mxu0
    %v2045 = vadd.f32 0.0, %v2044
    %v2046 = vpop.f32.mrf.mxu0
    %2047 = vmatprep.mubr.bf16.mxu0 0
    %2048 = vmatmul.mubr.bf16.gmra.mxu0 %v1955
    %v2049 = vpop.f32.mrf.mxu0
    %v2050 = vadd.f32 0.0, %v2049
    %v2051 = vpop.f32.mrf.mxu0
    %v2052 = vpop.f32.mrf.mxu0
    %v2053 = vadd.f32 0.0, %v2052
    %v2054 = vpop.f32.mrf.mxu0
    %2055 = vmatprep.mubr.bf16.mxu0 0
    %2056 = vmatmul.mubr.bf16.gmra.mxu0 %v1958
    %v2057 = vpop.f32.mrf.mxu0
    %v2058 = vadd.f32 0.0, %v2057
    %v2059 = vpop.f32.mrf.mxu0
    %v2060 = vpop.f32.mrf.mxu0
    %v2061 = vadd.f32 0.0, %v2060
    %v2062 = vpop.f32.mrf.mxu0
    %2063 = vmatprep.mubr.bf16.mxu0 0
    %2064 = vmatmul.mubr.bf16.gmra.mxu0 %v1961
    %v2065 = vpop.f32.mrf.mxu0
    %v2066 = vadd.f32 0.0, %v2065
    %v2067 = vpop.f32.mrf.mxu0
    %v2068 = vpop.f32.mrf.mxu0
    %v2069 = vadd.f32 0.0, %v2068
    %v2070 = vpop.f32.mrf.mxu0
    %2071 = vmatprep.mubr.bf16.mxu0 0
    %2072 = vmatmul.mubr.bf16.gmra.mxu0 %v1964
    %v2073 = vpop.f32.mrf.mxu0
    %v2074 = vadd.f32 0.0, %v2073
    %v2075 = vpop.f32.mrf.mxu0
    %v2076 = vpop.f32.mrf.mxu0
    %v2077 = vadd.f32 0.0, %v2076
    %v2078 = vpop.f32.mrf.mxu0
    %2079 = vmatprep.mubr.bf16.mxu0 0
    %2080 = vmatmul.mubr.bf16.gmra.mxu0 %v1967
    %v2081 = vpop.f32.mrf.mxu0
    %v2082 = vadd.f32 0.0, %v2081
    %v2083 = vpop.f32.mrf.mxu0
    %v2084 = vpop.f32.mrf.mxu0
    %v2085 = vadd.f32 0.0, %v2084
    %v2086 = vpop.f32.mrf.mxu0
    %2087 = vmatprep.mubr.bf16.mxu0 0
    %2088 = vmatmul.mubr.bf16.gmra.mxu0 %v1970
    %v2089 = vpop.f32.mrf.mxu0
    %v2090 = vadd.f32 0.0, %v2089
    %v2091 = vpop.f32.mrf.mxu0
    %v2092 = vpop.f32.mrf.mxu0
    %v2093 = vadd.f32 0.0, %v2092
    %v2094 = vpop.f32.mrf.mxu0
    %2095 = vmatprep.mubr.bf16.mxu0 0
    %2096 = vmatmul.mubr.bf16.gmra.mxu0 %v1973
    %v2097 = vpop.f32.mrf.mxu0
    %v2098 = vadd.f32 0.0, %v2097
    %v2099 = vpop.f32.mrf.mxu0
    %v2100 = vpop.f32.mrf.mxu0
    %v2101 = vadd.f32 0.0, %v2100
    %v2102 = vpop.f32.mrf.mxu0
    %2103 = vdwg.mxu0
    %v2104 = vadd.f32 %v1798, %v2010
    %v2105 = vadd.f32 %v1799, %v2013
    %v2106 = vadd.f32 %v1800, %v2018
    %v2107 = vadd.f32 %v1801, %v2021
    %v2108 = vadd.f32 %v1802, %v2026
    %v2109 = vadd.f32 %v1803, %v2029
    %v2110 = vadd.f32 %v1804, %v2034
    %v2111 = vadd.f32 %v1805, %v2037
    %v2112 = vadd.f32 %v1806, %v2042
    %v2113 = vadd.f32 %v1807, %v2045
    %v2114 = vadd.f32 %v1808, %v2050
    %v2115 = vadd.f32 %v1809, %v2053
    %v2116 = vadd.f32 %v1810, %v2058
    %v2117 = vadd.f32 %v1811, %v2061
    %v2118 = vadd.f32 %v1812, %v2066
    %v2119 = vadd.f32 %v1813, %v2069
    %v2120 = vadd.f32 %v1814, %v2074
    %v2121 = vadd.f32 %v1815, %v2077
    %v2122 = vadd.f32 %v1816, %v2082
    %v2123 = vadd.f32 %v1817, %v2085
    %v2124 = vadd.f32 %v1818, %v2090
    %v2125 = vadd.f32 %v1819, %v2093
    %v2126 = vadd.f32 %v1820, %v2098
    %v2127 = vadd.f32 %v1821, %v2101
    %v2128 = vld [vmem:[%s0 + $0x10] sm:$0xf]
    %v2129 = vld [vmem:[%s0 + $0x14] sm:$0xf]
    %v2130 = vld [vmem:[%s0 + $0x18] sm:$0xf]
    %v2131 = vld [vmem:[%s0 + $0x1c] sm:$0xf]
    %v2132 = vld [vmem:[%s0 + $0x20] sm:$0xf]
    %v2133 = vld [vmem:[%s0 + $0x24] sm:$0xf]
    %v2134 = vld [vmem:[%s0 + $0x28] sm:$0xf]
    %v2135 = vld [vmem:[%s0 + $0x2c] sm:$0xf]
    %v2136 = vld [vmem:[%s0 + $0x30] sm:$0xf]
    %v2137 = vld [vmem:[%s0 + $0x34] sm:$0xf]
    %v2138 = vld [vmem:[%s0 + $0x38] sm:$0xf]
    %v2139 = vld [vmem:[%s0 + $0x3c] sm:$0xf]
    %v2140 = vld [vmem:[%s0 + $0x40] sm:$0xf]
    %v2141 = vld [vmem:[%s0 + $0x44] sm:$0xf]
    %v2142 = vld [vmem:[%s0 + $0x48] sm:$0xf]
    %v2143 = vld [vmem:[%s0 + $0x4c] sm:$0xf]
    %v2144 = vld [vmem:[%s0 + $0x50] sm:$0xf]
    %v2145 = vld [vmem:[%s0 + $0x54] sm:$0xf]
    %v2146 = vld [vmem:[%s0 + $0x58] sm:$0xf]
    %v2147 = vld [vmem:[%s0 + $0x5c] sm:$0xf]
    %v2148 = vld [vmem:[%s0 + $0x60] sm:$0xf]
    %v2149 = vld [vmem:[%s0 + $0x64] sm:$0xf]
    %v2150 = vld [vmem:[%s0 + $0x68] sm:$0xf]
    %v2151 = vld [vmem:[%s0 + $0x6c] sm:$0xf]
    %v2152 = vld [vmem:[%s0 + $0x70] sm:$0x1]
    %s2153 = scalar_lea.vmem [#allocation2], 224
    %v2154 = vld [vmem:[%s2153] sm:$0xf]
    %v2155 = vld [vmem:[%s2153 + $0x4] sm:$0xf]
    %v2156 = vld [vmem:[%s2153 + $0x8] sm:$0xf]
    %v2157 = vld [vmem:[%s2153 + $0xc] sm:$0xf]
    %v2158 = vld [vmem:[%s2153 + $0x10] sm:$0xf]
    %v2159 = vld [vmem:[%s2153 + $0x14] sm:$0xf]
    %v2160 = vld [vmem:[%s2153 + $0x18] sm:$0xf]
    %v2161 = vld [vmem:[%s2153 + $0x1c] sm:$0xf]
    %v2187 = vunpack.c.l.b16 %v2128
    %v2188 = vunpack.c.l.b16 %v2129
    %v2189 = vunpack.c.l.b16 %v2130
    %v2190 = vunpack.c.l.b16 %v2131
    %v2191 = vunpack.c.l.b16 %v2132
    %v2192 = vunpack.c.l.b16 %v2133
    %v2193 = vunpack.c.l.b16 %v2134
    %v2194 = vunpack.c.l.b16 %v2135
    %v2195 = vunpack.c.l.b16 %v2136
    %v2196 = vunpack.c.l.b16 %v2137
    %v2197 = vunpack.c.l.b16 %v2138
    %v2198 = vunpack.c.l.b16 %v2139
    %v2199 = vunpack.c.l.b16 %v2140
    %v2200 = vunpack.c.l.b16 %v2141
    %v2201 = vunpack.c.l.b16 %v2142
    %v2202 = vunpack.c.l.b16 %v2143
    %v2203 = vunpack.c.l.b16 %v2144
    %v2204 = vunpack.c.l.b16 %v2145
    %v2205 = vunpack.c.l.b16 %v2146
    %v2206 = vunpack.c.l.b16 %v2147
    %v2207 = vunpack.c.l.b16 %v2148
    %v2208 = vunpack.c.l.b16 %v2149
    %v2209 = vunpack.c.l.b16 %v2150
    %v2210 = vunpack.c.l.b16 %v2151
    %v2211 = vunpack.c.l.b16 %v2152
    %v2212 = vpack.c.b16 %v2188, %v2187
    %v2213 = vpack.c.b16 %v2190, %v2189
    %v2214 = vpack.c.b16 %v2192, %v2191
    %v2215 = vpack.c.b16 %v2194, %v2193
    %v2216 = vpack.c.b16 %v2196, %v2195
    %v2217 = vpack.c.b16 %v2198, %v2197
    %v2218 = vpack.c.b16 %v2200, %v2199
    %v2219 = vpack.c.b16 %v2202, %v2201
    %v2220 = vpack.c.b16 %v2204, %v2203
    %v2221 = vpack.c.b16 %v2206, %v2205
    %v2222 = vpack.c.b16 %v2208, %v2207
    %v2223 = vpack.c.b16 %v2210, %v2209
    %v2224 = vpack.c.b16 %v2211, %v2211
    %v2226 = vshrl.u32 %v2212, 16
    %v2228 = vshll.u32 %v2212, 16
    %v2230 = vrot.slane %v2228, 1
    %v2231 = vor.u32 %v2226, %v2230
    %v2233 = vshll.u32 %v2213, 16
    %v2235 = vrot.slane %v2233, 1
    %v2236 = vsel %vm135, %v2231, %v2235
    %v2237 = vshrl.u32 %v2213, 16
    %v2239 = vor.u32 %v2237, %v2235
    %v2241 = vshll.u32 %v2214, 16
    %v2243 = vrot.slane %v2241, 1
    %v2244 = vsel %vm135, %v2239, %v2243
    %v2245 = vshrl.u32 %v2214, 16
    %v2247 = vor.u32 %v2245, %v2243
    %v2249 = vshll.u32 %v2215, 16
    %v2251 = vrot.slane %v2249, 1
    %v2252 = vsel %vm135, %v2247, %v2251
    %v2253 = vshrl.u32 %v2215, 16
    %v2255 = vor.u32 %v2253, %v2251
    %v2257 = vshll.u32 %v2216, 16
    %v2259 = vrot.slane %v2257, 1
    %v2260 = vsel %vm135, %v2255, %v2259
    %v2261 = vshrl.u32 %v2216, 16
    %v2263 = vor.u32 %v2261, %v2259
    %v2265 = vshll.u32 %v2217, 16
    %v2267 = vrot.slane %v2265, 1
    %v2268 = vsel %vm135, %v2263, %v2267
    %v2269 = vshrl.u32 %v2217, 16
    %v2271 = vor.u32 %v2269, %v2267
    %v2273 = vshll.u32 %v2218, 16
    %v2275 = vrot.slane %v2273, 1
    %v2276 = vsel %vm135, %v2271, %v2275
    %v2277 = vshrl.u32 %v2218, 16
    %v2279 = vor.u32 %v2277, %v2275
    %v2281 = vshll.u32 %v2219, 16
    %v2283 = vrot.slane %v2281, 1
    %v2284 = vsel %vm135, %v2279, %v2283
    %v2285 = vshrl.u32 %v2219, 16
    %v2287 = vor.u32 %v2285, %v2283
    %v2289 = vshll.u32 %v2220, 16
    %v2291 = vrot.slane %v2289, 1
    %v2292 = vsel %vm135, %v2287, %v2291
    %v2293 = vshrl.u32 %v2220, 16
    %v2295 = vor.u32 %v2293, %v2291
    %v2297 = vshll.u32 %v2221, 16
    %v2299 = vrot.slane %v2297, 1
    %v2300 = vsel %vm135, %v2295, %v2299
    %v2301 = vshrl.u32 %v2221, 16
    %v2303 = vor.u32 %v2301, %v2299
    %v2305 = vshll.u32 %v2222, 16
    %v2307 = vrot.slane %v2305, 1
    %v2308 = vsel %vm135, %v2303, %v2307
    %v2309 = vshrl.u32 %v2222, 16
    %v2311 = vor.u32 %v2309, %v2307
    %v2313 = vshll.u32 %v2223, 16
    %v2315 = vrot.slane %v2313, 1
    %v2316 = vsel %vm135, %v2311, %v2315
    %v2317 = vshrl.u32 %v2223, 16
    %v2319 = vor.u32 %v2317, %v2315
    %v2321 = vshll.u32 %v2224, 16
    %v2323 = vrot.slane %v2321, 1
    %v2324 = vsel %vm135, %v2319, %v2323
    %v2333 = vunpack.c.l.b16 %v2154
    %v2334 = vunpack.c.l.b16 %v2155
    %v2335 = vunpack.c.l.b16 %v2156
    %v2336 = vunpack.c.l.b16 %v2157
    %v2337 = vunpack.c.l.b16 %v2158
    %v2338 = vunpack.c.l.b16 %v2159
    %v2339 = vunpack.c.l.b16 %v2160
    %v2340 = vunpack.c.l.b16 %v2161
    %v2341 = vpack.c.b16 %v2334, %v2333
    %v2342 = vpack.c.b16 %v2336, %v2335
    %v2343 = vpack.c.b16 %v2338, %v2337
    %v2344 = vpack.c.b16 %v2340, %v2339
    %v2350 = vsel %vm260, %v2236, 0
    %v2353 = vsel %vm260, %v2244, 0
    %v2356 = vsel %vm260, %v2252, 0
    %v2359 = vsel %vm260, %v2260, 0
    %v2362 = vsel %vm260, %v2268, 0
    %v2365 = vsel %vm260, %v2276, 0
    %v2368 = vsel %vm260, %v2284, 0
    %v2371 = vsel %vm260, %v2292, 0
    %v2374 = vsel %vm260, %v2300, 0
    %v2377 = vsel %vm260, %v2308, 0
    %v2380 = vsel %vm260, %v2316, 0
    %v2383 = vsel %vm260, %v2324, 0
    %2385 = vmatprep.subr.bf16.mxu0 0
    %2386 = vmatpush1.bf16.msra.mxu0 0
    %2387 = vmatprep.subr.bf16.mxu0 0
    %2388 = vmatpush1.bf16.msra.mxu0 0
    %2389 = vmatprep.subr.bf16.mxu0 0
    %2390 = vmatpush1.bf16.msra.mxu0 0
    %2391 = vmatprep.subr.bf16.mxu0 0
    %2392 = vmatpush1.bf16.msra.mxu0 0
    %2393 = vmatprep.subr.bf16.mxu0 0
    %2394 = vmatpush1.bf16.msra.mxu0 %v2344
    %2395 = vmatprep.subr.bf16.mxu0 0
    %2396 = vmatpush1.bf16.msra.mxu0 %v2343
    %2397 = vmatprep.subr.bf16.mxu0 0
    %2398 = vmatpush1.bf16.msra.mxu0 %v2342
    %2399 = vmatprep.subr.bf16.mxu0 0
    %2400 = vmatpush1.bf16.msra.mxu0 %v2341
    %2401 = vmatprep.subr.bf16.mxu0 0
    %2402 = vmatpush2.bf16.msra.mxu0 0
    %2403 = vmatprep.subr.bf16.mxu0 0
    %2404 = vmatpush2.bf16.msra.mxu0 0
    %2405 = vmatprep.subr.bf16.mxu0 0
    %2406 = vmatpush2.bf16.msra.mxu0 0
    %2407 = vmatprep.subr.bf16.mxu0 0
    %2408 = vmatpush2.bf16.msra.mxu0 0
    %2409 = vmatprep.subr.bf16.mxu0 0
    %2410 = vmatpush2.bf16.msra.mxu0 0
    %2411 = vmatprep.subr.bf16.mxu0 0
    %2412 = vmatpush2.bf16.msra.mxu0 0
    %2413 = vmatprep.subr.bf16.mxu0 0
    %2414 = vmatpush2.bf16.msra.mxu0 0
    %2415 = vmatprep.subr.bf16.mxu0 0
    %2416 = vmatpush2.bf16.msra.mxu0 0
    %2417 = vmatprep.mubr.bf16.mxu0 0
    %2418 = vmatmul.mubr.bf16.gmra.mxu0 %v2350
    %v2419 = vpop.f32.mrf.mxu0
    %v2420 = vadd.f32 0.0, %v2419
    %v2421 = vpop.f32.mrf.mxu0
    %v2422 = vpop.f32.mrf.mxu0
    %v2423 = vadd.f32 0.0, %v2422
    %v2424 = vpop.f32.mrf.mxu0
    %2425 = vmatprep.mubr.bf16.mxu0 0
    %2426 = vmatmul.mubr.bf16.gmra.mxu0 %v2353
    %v2427 = vpop.f32.mrf.mxu0
    %v2428 = vadd.f32 0.0, %v2427
    %v2429 = vpop.f32.mrf.mxu0
    %v2430 = vpop.f32.mrf.mxu0
    %v2431 = vadd.f32 0.0, %v2430
    %v2432 = vpop.f32.mrf.mxu0
    %2433 = vmatprep.mubr.bf16.mxu0 0
    %2434 = vmatmul.mubr.bf16.gmra.mxu0 %v2356
    %v2435 = vpop.f32.mrf.mxu0
    %v2436 = vadd.f32 0.0, %v2435
    %v2437 = vpop.f32.mrf.mxu0
    %v2438 = vpop.f32.mrf.mxu0
    %v2439 = vadd.f32 0.0, %v2438
    %v2440 = vpop.f32.mrf.mxu0
    %2441 = vmatprep.mubr.bf16.mxu0 0
    %2442 = vmatmul.mubr.bf16.gmra.mxu0 %v2359
    %v2443 = vpop.f32.mrf.mxu0
    %v2444 = vadd.f32 0.0, %v2443
    %v2445 = vpop.f32.mrf.mxu0
    %v2446 = vpop.f32.mrf.mxu0
    %v2447 = vadd.f32 0.0, %v2446
    %v2448 = vpop.f32.mrf.mxu0
    %2449 = vmatprep.mubr.bf16.mxu0 0
    %2450 = vmatmul.mubr.bf16.gmra.mxu0 %v2362
    %v2451 = vpop.f32.mrf.mxu0
    %v2452 = vadd.f32 0.0, %v2451
    %v2453 = vpop.f32.mrf.mxu0
    %v2454 = vpop.f32.mrf.mxu0
    %v2455 = vadd.f32 0.0, %v2454
    %v2456 = vpop.f32.mrf.mxu0
    %2457 = vmatprep.mubr.bf16.mxu0 0
    %2458 = vmatmul.mubr.bf16.gmra.mxu0 %v2365
    %v2459 = vpop.f32.mrf.mxu0
    %v2460 = vadd.f32 0.0, %v2459
    %v2461 = vpop.f32.mrf.mxu0
    %v2462 = vpop.f32.mrf.mxu0
    %v2463 = vadd.f32 0.0, %v2462
    %v2464 = vpop.f32.mrf.mxu0
    %2465 = vmatprep.mubr.bf16.mxu0 0
    %2466 = vmatmul.mubr.bf16.gmra.mxu0 %v2368
    %v2467 = vpop.f32.mrf.mxu0
    %v2468 = vadd.f32 0.0, %v2467
    %v2469 = vpop.f32.mrf.mxu0
    %v2470 = vpop.f32.mrf.mxu0
    %v2471 = vadd.f32 0.0, %v2470
    %v2472 = vpop.f32.mrf.mxu0
    %2473 = vmatprep.mubr.bf16.mxu0 0
    %2474 = vmatmul.mubr.bf16.gmra.mxu0 %v2371
    %v2475 = vpop.f32.mrf.mxu0
    %v2476 = vadd.f32 0.0, %v2475
    %v2477 = vpop.f32.mrf.mxu0
    %v2478 = vpop.f32.mrf.mxu0
    %v2479 = vadd.f32 0.0, %v2478
    %v2480 = vpop.f32.mrf.mxu0
    %2481 = vmatprep.mubr.bf16.mxu0 0
    %2482 = vmatmul.mubr.bf16.gmra.mxu0 %v2374
    %v2483 = vpop.f32.mrf.mxu0
    %v2484 = vadd.f32 0.0, %v2483
    %v2485 = vpop.f32.mrf.mxu0
    %v2486 = vpop.f32.mrf.mxu0
    %v2487 = vadd.f32 0.0, %v2486
    %v2488 = vpop.f32.mrf.mxu0
    %2489 = vmatprep.mubr.bf16.mxu0 0
    %2490 = vmatmul.mubr.bf16.gmra.mxu0 %v2377
    %v2491 = vpop.f32.mrf.mxu0
    %v2492 = vadd.f32 0.0, %v2491
    %v2493 = vpop.f32.mrf.mxu0
    %v2494 = vpop.f32.mrf.mxu0
    %v2495 = vadd.f32 0.0, %v2494
    %v2496 = vpop.f32.mrf.mxu0
    %2497 = vmatprep.mubr.bf16.mxu0 0
    %2498 = vmatmul.mubr.bf16.gmra.mxu0 %v2380
    %v2499 = vpop.f32.mrf.mxu0
    %v2500 = vadd.f32 0.0, %v2499
    %v2501 = vpop.f32.mrf.mxu0
    %v2502 = vpop.f32.mrf.mxu0
    %v2503 = vadd.f32 0.0, %v2502
    %v2504 = vpop.f32.mrf.mxu0
    %2505 = vmatprep.mubr.bf16.mxu0 0
    %2506 = vmatmul.mubr.bf16.gmra.mxu0 %v2383
    %v2507 = vpop.f32.mrf.mxu0
    %v2508 = vadd.f32 0.0, %v2507
    %v2509 = vpop.f32.mrf.mxu0
    %v2510 = vpop.f32.mrf.mxu0
    %v2511 = vadd.f32 0.0, %v2510
    %v2512 = vpop.f32.mrf.mxu0
    %2513 = vdwg.mxu0
    %v2514 = vadd.f32 %v2104, %v2420
    %v2515 = vadd.f32 %v2105, %v2423
    %v2516 = vadd.f32 %v2106, %v2428
    %v2517 = vadd.f32 %v2107, %v2431
    %v2518 = vadd.f32 %v2108, %v2436
    %v2519 = vadd.f32 %v2109, %v2439
    %v2520 = vadd.f32 %v2110, %v2444
    %v2521 = vadd.f32 %v2111, %v2447
    %v2522 = vadd.f32 %v2112, %v2452
    %v2523 = vadd.f32 %v2113, %v2455
    %v2524 = vadd.f32 %v2114, %v2460
    %v2525 = vadd.f32 %v2115, %v2463
    %v2526 = vadd.f32 %v2116, %v2468
    %v2527 = vadd.f32 %v2117, %v2471
    %v2528 = vadd.f32 %v2118, %v2476
    %v2529 = vadd.f32 %v2119, %v2479
    %v2530 = vadd.f32 %v2120, %v2484
    %v2531 = vadd.f32 %v2121, %v2487
    %v2532 = vadd.f32 %v2122, %v2492
    %v2533 = vadd.f32 %v2123, %v2495
    %v2534 = vadd.f32 %v2124, %v2500
    %v2535 = vadd.f32 %v2125, %v2503
    %v2536 = vadd.f32 %v2126, %v2508
    %v2537 = vadd.f32 %v2127, %v2511
    %v2538 = vld [vmem:[%s0 + $0x10] sm:$0xe]
    %s2539 = scalar_lea.vmem [#allocation2], 256
    %v2540 = vld [vmem:[%s2539] sm:$0xf]
    %v2541 = vld [vmem:[%s2539 + $0x4] sm:$0xf]
    %v2542 = vld [vmem:[%s2539 + $0x8] sm:$0xf]
    %v2543 = vld [vmem:[%s2539 + $0xc] sm:$0xf]
    %v2544 = vld [vmem:[%s2539 + $0x10] sm:$0xf]
    %v2545 = vld [vmem:[%s2539 + $0x14] sm:$0xf]
    %v2546 = vld [vmem:[%s2539 + $0x18] sm:$0xf]
    %v2547 = vld [vmem:[%s2539 + $0x1c] sm:$0xf]
    %v2549 = vunpack.c.l.b16 %v2538
    %v2550 = vpack.c.b16 %v2188, %v2549
    %v2551 = vrot.slane %v2550, 1
    %v2552 = vrot.slane %v2213, 1
    %v2553 = vsel %vm616, %v2551, %v2552
    %v2554 = vrot.slane %v2214, 1
    %v2555 = vsel %vm616, %v2552, %v2554
    %v2556 = vrot.slane %v2215, 1
    %v2557 = vsel %vm616, %v2554, %v2556
    %v2558 = vrot.slane %v2216, 1
    %v2559 = vsel %vm616, %v2556, %v2558
    %v2560 = vrot.slane %v2217, 1
    %v2561 = vsel %vm616, %v2558, %v2560
    %v2562 = vrot.slane %v2218, 1
    %v2563 = vsel %vm616, %v2560, %v2562
    %v2564 = vrot.slane %v2219, 1
    %v2565 = vsel %vm616, %v2562, %v2564
    %v2566 = vrot.slane %v2220, 1
    %v2567 = vsel %vm616, %v2564, %v2566
    %v2568 = vrot.slane %v2221, 1
    %v2569 = vsel %vm616, %v2566, %v2568
    %v2570 = vrot.slane %v2222, 1
    %v2571 = vsel %vm616, %v2568, %v2570
    %v2572 = vrot.slane %v2223, 1
    %v2573 = vsel %vm616, %v2570, %v2572
    %v2574 = vrot.slane %v2224, 1
    %v2575 = vsel %vm616, %v2572, %v2574
    %v2584 = vunpack.c.l.b16 %v2540
    %v2585 = vunpack.c.l.b16 %v2541
    %v2586 = vunpack.c.l.b16 %v2542
    %v2587 = vunpack.c.l.b16 %v2543
    %v2588 = vunpack.c.l.b16 %v2544
    %v2589 = vunpack.c.l.b16 %v2545
    %v2590 = vunpack.c.l.b16 %v2546
    %v2591 = vunpack.c.l.b16 %v2547
    %v2592 = vpack.c.b16 %v2585, %v2584
    %v2593 = vpack.c.b16 %v2587, %v2586
    %v2594 = vpack.c.b16 %v2589, %v2588
    %v2595 = vpack.c.b16 %v2591, %v2590
    %v2601 = vsel %vm260, %v2553, 0
    %v2604 = vsel %vm260, %v2555, 0
    %v2607 = vsel %vm260, %v2557, 0
    %v2610 = vsel %vm260, %v2559, 0
    %v2613 = vsel %vm260, %v2561, 0
    %v2616 = vsel %vm260, %v2563, 0
    %v2619 = vsel %vm260, %v2565, 0
    %v2622 = vsel %vm260, %v2567, 0
    %v2625 = vsel %vm260, %v2569, 0
    %v2628 = vsel %vm260, %v2571, 0
    %v2631 = vsel %vm260, %v2573, 0
    %v2634 = vsel %vm260, %v2575, 0
    %2636 = vmatprep.subr.bf16.mxu0 0
    %2637 = vmatpush1.bf16.msra.mxu0 0
    %2638 = vmatprep.subr.bf16.mxu0 0
    %2639 = vmatpush1.bf16.msra.mxu0 0
    %2640 = vmatprep.subr.bf16.mxu0 0
    %2641 = vmatpush1.bf16.msra.mxu0 0
    %2642 = vmatprep.subr.bf16.mxu0 0
    %2643 = vmatpush1.bf16.msra.mxu0 0
    %2644 = vmatprep.subr.bf16.mxu0 0
    %2645 = vmatpush1.bf16.msra.mxu0 %v2595
    %2646 = vmatprep.subr.bf16.mxu0 0
    %2647 = vmatpush1.bf16.msra.mxu0 %v2594
    %2648 = vmatprep.subr.bf16.mxu0 0
    %2649 = vmatpush1.bf16.msra.mxu0 %v2593
    %2650 = vmatprep.subr.bf16.mxu0 0
    %2651 = vmatpush1.bf16.msra.mxu0 %v2592
    %2652 = vmatprep.subr.bf16.mxu0 0
    %2653 = vmatpush2.bf16.msra.mxu0 0
    %2654 = vmatprep.subr.bf16.mxu0 0
    %2655 = vmatpush2.bf16.msra.mxu0 0
    %2656 = vmatprep.subr.bf16.mxu0 0
    %2657 = vmatpush2.bf16.msra.mxu0 0
    %2658 = vmatprep.subr.bf16.mxu0 0
    %2659 = vmatpush2.bf16.msra.mxu0 0
    %2660 = vmatprep.subr.bf16.mxu0 0
    %2661 = vmatpush2.bf16.msra.mxu0 0
    %2662 = vmatprep.subr.bf16.mxu0 0
    %2663 = vmatpush2.bf16.msra.mxu0 0
    %2664 = vmatprep.subr.bf16.mxu0 0
    %2665 = vmatpush2.bf16.msra.mxu0 0
    %2666 = vmatprep.subr.bf16.mxu0 0
    %2667 = vmatpush2.bf16.msra.mxu0 0
    %2668 = vmatprep.mubr.bf16.mxu0 0
    %2669 = vmatmul.mubr.bf16.gmra.mxu0 %v2601
    %v2670 = vpop.f32.mrf.mxu0
    %v2671 = vadd.f32 0.0, %v2670
    %v2672 = vpop.f32.mrf.mxu0
    %v2673 = vpop.f32.mrf.mxu0
    %v2674 = vadd.f32 0.0, %v2673
    %v2675 = vpop.f32.mrf.mxu0
    %2676 = vmatprep.mubr.bf16.mxu0 0
    %2677 = vmatmul.mubr.bf16.gmra.mxu0 %v2604
    %v2678 = vpop.f32.mrf.mxu0
    %v2679 = vadd.f32 0.0, %v2678
    %v2680 = vpop.f32.mrf.mxu0
    %v2681 = vpop.f32.mrf.mxu0
    %v2682 = vadd.f32 0.0, %v2681
    %v2683 = vpop.f32.mrf.mxu0
    %2684 = vmatprep.mubr.bf16.mxu0 0
    %2685 = vmatmul.mubr.bf16.gmra.mxu0 %v2607
    %v2686 = vpop.f32.mrf.mxu0
    %v2687 = vadd.f32 0.0, %v2686
    %v2688 = vpop.f32.mrf.mxu0
    %v2689 = vpop.f32.mrf.mxu0
    %v2690 = vadd.f32 0.0, %v2689
    %v2691 = vpop.f32.mrf.mxu0
    %2692 = vmatprep.mubr.bf16.mxu0 0
    %2693 = vmatmul.mubr.bf16.gmra.mxu0 %v2610
    %v2694 = vpop.f32.mrf.mxu0
    %v2695 = vadd.f32 0.0, %v2694
    %v2696 = vpop.f32.mrf.mxu0
    %v2697 = vpop.f32.mrf.mxu0
    %v2698 = vadd.f32 0.0, %v2697
    %v2699 = vpop.f32.mrf.mxu0
    %2700 = vmatprep.mubr.bf16.mxu0 0
    %2701 = vmatmul.mubr.bf16.gmra.mxu0 %v2613
    %v2702 = vpop.f32.mrf.mxu0
    %v2703 = vadd.f32 0.0, %v2702
    %v2704 = vpop.f32.mrf.mxu0
    %v2705 = vpop.f32.mrf.mxu0
    %v2706 = vadd.f32 0.0, %v2705
    %v2707 = vpop.f32.mrf.mxu0
    %2708 = vmatprep.mubr.bf16.mxu0 0
    %2709 = vmatmul.mubr.bf16.gmra.mxu0 %v2616
    %v2710 = vpop.f32.mrf.mxu0
    %v2711 = vadd.f32 0.0, %v2710
    %v2712 = vpop.f32.mrf.mxu0
    %v2713 = vpop.f32.mrf.mxu0
    %v2714 = vadd.f32 0.0, %v2713
    %v2715 = vpop.f32.mrf.mxu0
    %2716 = vmatprep.mubr.bf16.mxu0 0
    %2717 = vmatmul.mubr.bf16.gmra.mxu0 %v2619
    %v2718 = vpop.f32.mrf.mxu0
    %v2719 = vadd.f32 0.0, %v2718
    %v2720 = vpop.f32.mrf.mxu0
    %v2721 = vpop.f32.mrf.mxu0
    %v2722 = vadd.f32 0.0, %v2721
    %v2723 = vpop.f32.mrf.mxu0
    %2724 = vmatprep.mubr.bf16.mxu0 0
    %2725 = vmatmul.mubr.bf16.gmra.mxu0 %v2622
    %v2726 = vpop.f32.mrf.mxu0
    %v2727 = vadd.f32 0.0, %v2726
    %v2728 = vpop.f32.mrf.mxu0
    %v2729 = vpop.f32.mrf.mxu0
    %v2730 = vadd.f32 0.0, %v2729
    %v2731 = vpop.f32.mrf.mxu0
    %2732 = vmatprep.mubr.bf16.mxu0 0
    %2733 = vmatmul.mubr.bf16.gmra.mxu0 %v2625
    %v2734 = vpop.f32.mrf.mxu0
    %v2735 = vadd.f32 0.0, %v2734
    %v2736 = vpop.f32.mrf.mxu0
    %v2737 = vpop.f32.mrf.mxu0
    %v2738 = vadd.f32 0.0, %v2737
    %v2739 = vpop.f32.mrf.mxu0
    %2740 = vmatprep.mubr.bf16.mxu0 0
    %2741 = vmatmul.mubr.bf16.gmra.mxu0 %v2628
    %v2742 = vpop.f32.mrf.mxu0
    %v2743 = vadd.f32 0.0, %v2742
    %v2744 = vpop.f32.mrf.mxu0
    %v2745 = vpop.f32.mrf.mxu0
    %v2746 = vadd.f32 0.0, %v2745
    %v2747 = vpop.f32.mrf.mxu0
    %2748 = vmatprep.mubr.bf16.mxu0 0
    %2749 = vmatmul.mubr.bf16.gmra.mxu0 %v2631
    %v2750 = vpop.f32.mrf.mxu0
    %v2751 = vadd.f32 0.0, %v2750
    %v2752 = vpop.f32.mrf.mxu0
    %v2753 = vpop.f32.mrf.mxu0
    %v2754 = vadd.f32 0.0, %v2753
    %v2755 = vpop.f32.mrf.mxu0
    %2756 = vmatprep.mubr.bf16.mxu0 0
    %2757 = vmatmul.mubr.bf16.gmra.mxu0 %v2634
    %v2758 = vpop.f32.mrf.mxu0
    %v2759 = vadd.f32 0.0, %v2758
    %v2760 = vpop.f32.mrf.mxu0
    %v2761 = vpop.f32.mrf.mxu0
    %v2762 = vadd.f32 0.0, %v2761
    %v2763 = vpop.f32.mrf.mxu0
    %2764 = vdwg.mxu0
    %v2765 = vadd.f32 %v2514, %v2671
    %v2766 = vadd.f32 %v2515, %v2674
    %v2767 = vadd.f32 %v2516, %v2679
    %v2768 = vadd.f32 %v2517, %v2682
    %v2769 = vadd.f32 %v2518, %v2687
    %v2770 = vadd.f32 %v2519, %v2690
    %v2771 = vadd.f32 %v2520, %v2695
    %v2772 = vadd.f32 %v2521, %v2698
    %v2773 = vadd.f32 %v2522, %v2703
    %v2774 = vadd.f32 %v2523, %v2706
    %v2775 = vadd.f32 %v2524, %v2711
    %v2776 = vadd.f32 %v2525, %v2714
    %v2777 = vadd.f32 %v2526, %v2719
    %v2778 = vadd.f32 %v2527, %v2722
    %v2779 = vadd.f32 %v2528, %v2727
    %v2780 = vadd.f32 %v2529, %v2730
    %v2781 = vadd.f32 %v2530, %v2735
    %v2782 = vadd.f32 %v2531, %v2738
    %v2783 = vadd.f32 %v2532, %v2743
    %v2784 = vadd.f32 %v2533, %v2746
    %v2785 = vadd.f32 %v2534, %v2751
    %v2786 = vadd.f32 %v2535, %v2754
    %v2787 = vadd.f32 %v2536, %v2759
    %v2788 = vadd.f32 %v2537, %v2762
    %v2790 = vlaneseq
    %v2791 = vshrl.u32 %v2790, 7
    %v2792 = vsub.s32 0, %v2791
    %v2793 = vrot.slane %v29, %v2792
    %v2795 = vadd.f32 %v2765, %v2793
    %v2796 = vadd.f32 %v2766, %v2793
    %v2797 = vadd.f32 %v2767, %v2793
    %v2798 = vadd.f32 %v2768, %v2793
    %v2799 = vadd.f32 %v2769, %v2793
    %v2800 = vadd.f32 %v2770, %v2793
    %v2801 = vadd.f32 %v2771, %v2793
    %v2802 = vadd.f32 %v2772, %v2793
    %v2803 = vadd.f32 %v2773, %v2793
    %v2804 = vadd.f32 %v2774, %v2793
    %v2805 = vadd.f32 %v2775, %v2793
    %v2806 = vadd.f32 %v2776, %v2793
    %v2807 = vadd.f32 %v2777, %v2793
    %v2808 = vadd.f32 %v2778, %v2793
    %v2809 = vadd.f32 %v2779, %v2793
    %v2810 = vadd.f32 %v2780, %v2793
    %v2811 = vadd.f32 %v2781, %v2793
    %v2812 = vadd.f32 %v2782, %v2793
    %v2813 = vadd.f32 %v2783, %v2793
    %v2814 = vadd.f32 %v2784, %v2793
    %v2815 = vadd.f32 %v2785, %v2793
    %v2816 = vadd.f32 %v2786, %v2793
    %v2817 = vadd.f32 %v2787, %v2793
    %v2818 = vadd.f32 %v2788, %v2793
    %v2819 = vpack.c.bf16 %v2796, %v2795
    %v2820 = vpack.c.bf16 %v2798, %v2797
    %v2821 = vpack.c.bf16 %v2800, %v2799
    %v2822 = vpack.c.bf16 %v2802, %v2801
    %v2823 = vpack.c.bf16 %v2804, %v2803
    %v2824 = vpack.c.bf16 %v2806, %v2805
    %v2825 = vpack.c.bf16 %v2808, %v2807
    %v2826 = vpack.c.bf16 %v2810, %v2809
    %v2827 = vpack.c.bf16 %v2812, %v2811
    %v2828 = vpack.c.bf16 %v2814, %v2813
    %v2829 = vpack.c.bf16 %v2816, %v2815
    %v2830 = vpack.c.bf16 %v2818, %v2817
    %v2832 = vunpack.c.l.b16 %v2819
    %v2833 = vunpack.c.h.b16 %v2819
    %v2834 = vpack.c.b16 %v2832, %v2832
    %v2835 = vpack.c.b16 %v2833, %v2833
    %2838 = vst [vmem:[%s3] sm:$0xf] %v2834
    %2839 = vst [vmem:[%s3 + $0x4] sm:$0x1] %v2835
    %v2841 = vunpack.c.l.b16 %v2820
    %v2842 = vunpack.c.h.b16 %v2820
    %v2843 = vpack.c.b16 %v2841, %v2841
    %v2844 = vpack.c.b16 %v2842, %v2842
    %s2847 = scalar_lea.vmem %s3, 8
    %2848 = vst [vmem:[%s2847] sm:$0xf] %v2843
    %2849 = vst [vmem:[%s2847 + $0x4] sm:$0x1] %v2844
    %v2851 = vunpack.c.l.b16 %v2821
    %v2852 = vunpack.c.h.b16 %v2821
    %v2853 = vpack.c.b16 %v2851, %v2851
    %v2854 = vpack.c.b16 %v2852, %v2852
    %s2857 = scalar_lea.vmem %s3, 16
    %2858 = vst [vmem:[%s2857] sm:$0xf] %v2853
    %2859 = vst [vmem:[%s2857 + $0x4] sm:$0x1] %v2854
    %v2861 = vunpack.c.l.b16 %v2822
    %v2862 = vunpack.c.h.b16 %v2822
    %v2863 = vpack.c.b16 %v2861, %v2861
    %v2864 = vpack.c.b16 %v2862, %v2862
    %s2867 = scalar_lea.vmem %s3, 24
    %2868 = vst [vmem:[%s2867] sm:$0xf] %v2863
    %2869 = vst [vmem:[%s2867 + $0x4] sm:$0x1] %v2864
    %v2871 = vunpack.c.l.b16 %v2823
    %v2872 = vunpack.c.h.b16 %v2823
    %v2873 = vpack.c.b16 %v2871, %v2871
    %v2874 = vpack.c.b16 %v2872, %v2872
    %s2877 = scalar_lea.vmem %s3, 32
    %2878 = vst [vmem:[%s2877] sm:$0xf] %v2873
    %2879 = vst [vmem:[%s2877 + $0x4] sm:$0x1] %v2874
    %v2881 = vunpack.c.l.b16 %v2824
    %v2882 = vunpack.c.h.b16 %v2824
    %v2883 = vpack.c.b16 %v2881, %v2881
    %v2884 = vpack.c.b16 %v2882, %v2882
    %s2887 = scalar_lea.vmem %s3, 40
    %2888 = vst [vmem:[%s2887] sm:$0xf] %v2883
    %2889 = vst [vmem:[%s2887 + $0x4] sm:$0x1] %v2884
    %v2891 = vunpack.c.l.b16 %v2825
    %v2892 = vunpack.c.h.b16 %v2825
    %v2893 = vpack.c.b16 %v2891, %v2891
    %v2894 = vpack.c.b16 %v2892, %v2892
    %s2897 = scalar_lea.vmem %s3, 48
    %2898 = vst [vmem:[%s2897] sm:$0xf] %v2893
    %2899 = vst [vmem:[%s2897 + $0x4] sm:$0x1] %v2894
    %v2901 = vunpack.c.l.b16 %v2826
    %v2902 = vunpack.c.h.b16 %v2826
    %v2903 = vpack.c.b16 %v2901, %v2901
    %v2904 = vpack.c.b16 %v2902, %v2902
    %s2907 = scalar_lea.vmem %s3, 56
    %2908 = vst [vmem:[%s2907] sm:$0xf] %v2903
    %2909 = vst [vmem:[%s2907 + $0x4] sm:$0x1] %v2904
    %v2911 = vunpack.c.l.b16 %v2827
    %v2912 = vunpack.c.h.b16 %v2827
    %v2913 = vpack.c.b16 %v2911, %v2911
    %v2914 = vpack.c.b16 %v2912, %v2912
    %s2917 = scalar_lea.vmem %s3, 64
    %2918 = vst [vmem:[%s2917] sm:$0xf] %v2913
    %2919 = vst [vmem:[%s2917 + $0x4] sm:$0x1] %v2914
    %v2921 = vunpack.c.l.b16 %v2828
    %v2922 = vunpack.c.h.b16 %v2828
    %v2923 = vpack.c.b16 %v2921, %v2921
    %v2924 = vpack.c.b16 %v2922, %v2922
    %s2927 = scalar_lea.vmem %s3, 72
    %2928 = vst [vmem:[%s2927] sm:$0xf] %v2923
    %2929 = vst [vmem:[%s2927 + $0x4] sm:$0x1] %v2924
    %v2931 = vunpack.c.l.b16 %v2829
    %v2932 = vunpack.c.h.b16 %v2829
    %v2933 = vpack.c.b16 %v2931, %v2931
    %v2934 = vpack.c.b16 %v2932, %v2932
    %s2937 = scalar_lea.vmem %s3, 80
    %2938 = vst [vmem:[%s2937] sm:$0xf] %v2933
    %2939 = vst [vmem:[%s2937 + $0x4] sm:$0x1] %v2934
    %v2941 = vunpack.c.l.b16 %v2830
    %v2942 = vunpack.c.h.b16 %v2830
    %v2943 = vpack.c.b16 %v2941, %v2941
    %v2944 = vpack.c.b16 %v2942, %v2942
    %s2947 = scalar_lea.vmem %s3, 88
    %2948 = vst [vmem:[%s2947] sm:$0xf] %v2943
    %2949 = vst [vmem:[%s2947 + $0x4] sm:$0x1] %v2944
    // Predicated region
    $region18: #{tpu_custom_call.1} parent=1 // pred_check
      _
    $region19: #{tpu_custom_call.1} parent=1 // pred_check_branch
      %2951 = sbr.rel (0) target = $region21
    $region20: #{tpu_custom_call.1} parent=1 // pred_region
      _
    $region21: #{tpu_custom_call.1} parent=1 // pred_fallthru
      _
    // Predicated region
    $region22: #{tpu_custom_call.1} parent=1 // pred_check
      _
    $region23: #{tpu_custom_call.1} parent=1 // pred_check_branch
      %2953 = sbr.rel (0) target = $region25
    $region24: #{tpu_custom_call.1} parent=1 // pred_region
      _
    $region25: #{tpu_custom_call.1} parent=1 // pred_fallthru
      _
    %2954 = vsyncpa [#allocation3], 1

</llo_original>
